<compile_context>
chip_gen: v7x
topology: tpu7x:2x2x1
jax: 0.10.0
libtpu: 0.0.40
codegen_flags: <defaults>
</compile_context>

<pallas_src>
import math
from functools import partial

import jax
import jax.numpy as jnp
from jax.experimental import pallas as pl
from jax.experimental.pallas import tpu as pltpu

LANES = 128
SUBLANES = 8
MIN_ELEMS = SUBLANES * LANES          # below this, pure-jnp fallback
MAX_BLOCK_ROWS = 8192                 # (8192, 128) f32 = 4 MiB per buffer
MIN_SPLIT_ROWS = 1024                 # only split a single-tile workload if
                                      # each half keeps >= 1024 rows (512 KiB)
VMEM_LIMIT_BYTES = 32 * 1024 * 1024   # safe on v5e/v6e (128 MiB) and v7x (64 MiB)


def _round_up(x: int, m: int) -> int:
    return ((x + m - 1) // m) * m


def _multi_tensorcore() -> bool:
    """True on chips whose ('parallel',) grid is split across TensorCores.

    v4 / v5p (megacore) and v7x (dual TC) benefit from a >=2, even grid;
    v5e / v6e are single-TC so a forced split is pure per-step overhead.
    Unknown devices default to False (the safe, single-block choice).
    """
    try:
        kind = jax.devices()[0].device_kind.lower()
    except Exception:
        return False
    if any(s in kind for s in ("v5 lite", "v5e", "v5litepod", "v6 lite", "v6e")):
        return False
    return any(s in kind for s in ("v4", "v5p", "v7", "7x"))


def _pick_block_rows(rows: int, multi_tc: bool) -> int:
    """Choose the sublane-dim block size for a (rows, 128) slab."""
    if rows <= MAX_BLOCK_ROWS:
        if multi_tc and rows >= 2 * MIN_SPLIT_ROWS:
            # Two balanced blocks so both TensorCores get half the work.
            return _round_up(pl.cdiv(rows, 2), SUBLANES)
        # Single-TC chips (or small inputs): one big block, no forced split.
        return rows  # block dim == full array dim is always legal
    # Many blocks: use max-size tiles; on multi-TC chips keep the grid even so
    # the two cores stay balanced.
    nblk = pl.cdiv(rows, MAX_BLOCK_ROWS)
    if multi_tc and nblk % 2 == 1:
        nblk += 1
    return min(MAX_BLOCK_ROWS, _round_up(pl.cdiv(rows, nblk), SUBLANES))


def _cosine_cutoff_kernel(d_ref, o_ref, *, scale, cutoff):
    # d_ref: (block_rows, 128) tile in the input's native dtype (f32 or bf16);
    # o_ref: matching f32 tile.  `scale` = pi/cutoff and `cutoff` are baked in
    # as compile-time constants (matches the PyTorch module's buffer).
    d = d_ref[...].astype(jnp.float32)
    f = 0.5 * (jnp.cos(d * scale) + 1.0)
    # Note: jnp.where maps NaN distances to 0 (torch's mask-multiply would
    # propagate NaN); irrelevant for physical distances.
    o_ref[...] = jnp.where(d < cutoff, f, 0.0)


def cosine_cutoff(distances: jax.Array, cutoff: float = 5.0) -> jax.Array:
    """Elementwise Behler cosine cutoff via a Pallas TPU kernel.

    Accepts a distance tensor of any shape; returns the same shape, float32.
    `cutoff` must be a Python float (it is folded into the kernel as a
    compile-time constant; a traced value would raise and a new value
    triggers a recompile).
    """
    orig_shape = distances.shape
    cutoff = float(cutoff)
    scale = math.pi / cutoff

    # Keep the native dtype for f32/bf16 (cast happens inside the kernel);
    # anything else (f64, ints, fp16) is upcast once in the wrapper.
    if distances.dtype in (jnp.float32, jnp.bfloat16):
        d = distances.reshape(-1)
    else:
        d = distances.astype(jnp.float32).reshape(-1)
    n = d.shape[0]

    if n == 0:
        return jnp.zeros(orig_shape, jnp.float32)

    # Tiny inputs: pallas_call launch overhead dwarfs the compute.
    if n < MIN_ELEMS:
        d32 = d.astype(jnp.float32)
        f = 0.5 * (jnp.cos(d32 * scale) + 1.0)
        return jnp.where(d32 < cutoff, f, 0.0).reshape(orig_shape)

    rows = pl.cdiv(n, LANES)
    n_pad = rows * LANES
    if n_pad != n:
        # TODO(synk): pad + final slice are two extra HBM passes for
        # 128-misaligned edge counts; fully removing them needs the cutoff
        # fused into its producer/consumer (or a rank-1 pipeline).  The
        # 128-aligned path below is zero-copy.
        d = jnp.pad(d, (0, n_pad - n))
    d2 = d.reshape(rows, LANES)  # bitcast-free reshape when n is aligned

    block_rows = _pick_block_rows(rows, _multi_tensorcore())
    grid = (pl.cdiv(rows, block_rows),)

    out = pl.pallas_call(
        partial(_cosine_cutoff_kernel, scale=scale, cutoff=cutoff),
        out_shape=jax.ShapeDtypeStruct((rows, LANES), jnp.float32),
        grid_spec=pltpu.PrefetchScalarGridSpec(
            num_scalar_prefetch=0,
            grid=grid,
            in_specs=[pl.BlockSpec((block_rows, LANES), lambda i: (i, 0))],
            out_specs=pl.BlockSpec((block_rows, LANES), lambda i: (i, 0)),
        ),
        compiler_params=pltpu.CompilerParams(
            dimension_semantics=("parallel",),
            vmem_limit_bytes=VMEM_LIMIT_BYTES,
        ),
    )(d2)

    if n_pad != n:
        out = out.reshape(-1)[:n]
    return out.reshape(orig_shape)


def cosine_cutoff_ref(distances: jax.Array, cutoff: float = 5.0) -> jax.Array:
    d = distances.astype(jnp.float32)
    f = 0.5 * (jnp.cos(d * (math.pi / cutoff)) + 1.0)
    return f * (d < cutoff).astype(jnp.float32)


if __name__ == "__main__":
    key = jax.random.PRNGKey(0)
    k1, k2, k3, k4 = jax.random.split(key, 4)
    cutoff = 5.0

    # 1) 128-aligned edge list (zero-copy fast path), float32.
    d_aligned = jax.random.uniform(k1, (16384,), minval=0.0, maxval=8.0,
                                   dtype=jnp.float32)
    out = jax.block_until_ready(cosine_cutoff(d_aligned, cutoff))
    assert out.shape == d_aligned.shape and out.dtype == jnp.float32
    assert jnp.allclose(out, cosine_cutoff_ref(d_aligned, cutoff),
                        atol=1e-5, rtol=1e-5), "aligned path mismatch"

    # 2) Misaligned edge list -> pad/slice path + partial last block.
    d_mis = jax.random.uniform(k2, (20000,), minval=0.0, maxval=8.0,
                               dtype=jnp.float32)
    out = jax.block_until_ready(cosine_cutoff(d_mis, cutoff))
    assert out.shape == d_mis.shape
    assert jnp.allclose(out, cosine_cutoff_ref(d_mis, cutoff),
                        atol=1e-5, rtol=1e-5), "misaligned path mismatch"

    # 3) bf16 distances read natively by the kernel (float32 output), 2-D shape.
    d_bf16 = jax.random.uniform(k3, (64, 256), minval=0.0, maxval=8.0,
                                dtype=jnp.float32).astype(jnp.bfloat16)
    out = jax.block_until_ready(cosine_cutoff(d_bf16, cutoff))
    assert out.shape == d_bf16.shape and out.dtype == jnp.float32
    assert jnp.allclose(out, cosine_cutoff_ref(d_bf16, cutoff),
                        atol=1e-4, rtol=1e-4), "bf16 path mismatch"

    # 4) Tiny edge list -> pure-jnp fallback.
    d_small = jax.random.uniform(k4, (1000,), minval=0.0, maxval=8.0,
                                 dtype=jnp.float32)
    out = jax.block_until_ready(cosine_cutoff(d_small, cutoff))
    assert out.shape == d_small.shape
    assert jnp.allclose(out, cosine_cutoff_ref(d_small, cutoff),
                        atol=1e-5, rtol=1e-5), "fallback mismatch"

    print("KERNEL_OK")
</pallas_src>

<mosaic_0001>
module attributes {stable_mosaic.version = 11 : i64} {
  func.func @_cosine_cutoff_kernel(%arg0: i32, %arg1: memref<128x128xf32, #tpu.memory_space<vmem>>, %arg2: memref<128x128xf32, #tpu.memory_space<vmem>>) attributes {dimension_semantics = [#tpu.dimension_semantics<parallel>], iteration_bounds = array<i64: 1>, scalar_prefetch = 0 : i64, scratch_operands = 0 : i64, tpu.core_type = #tpu.core_type<tc>, window_params = [{transform_indices = @transform_0, window_bounds = array<i64: 128, 128>}, {transform_indices = @transform_1, window_bounds = array<i64: 128, 128>}]} {
    %c0 = arith.constant 0 : index
    %c0_0 = arith.constant 0 : index
    %0 = vector.load %arg1[%c0, %c0_0] : memref<128x128xf32, #tpu.memory_space<vmem>>, vector<128x128xf32>
    %cst = arith.constant 0.628318548 : f32
    %1 = vector.broadcast %cst : f32 to vector<128x128xf32>
    %2 = arith.mulf %0, %1 : vector<128x128xf32>
    %3 = math.cos %2 : vector<128x128xf32>
    %cst_1 = arith.constant 1.000000e+00 : f32
    %4 = vector.broadcast %cst_1 : f32 to vector<128x128xf32>
    %5 = arith.addf %3, %4 : vector<128x128xf32>
    %cst_2 = arith.constant 5.000000e-01 : f32
    %6 = vector.broadcast %cst_2 : f32 to vector<128x128xf32>
    %7 = arith.mulf %6, %5 : vector<128x128xf32>
    %cst_3 = arith.constant 5.000000e+00 : f32
    %8 = vector.broadcast %cst_3 : f32 to vector<128x128xf32>
    %9 = arith.cmpf olt, %0, %8 : vector<128x128xf32>
    %cst_4 = arith.constant 0.000000e+00 : f32
    %10 = vector.broadcast %cst_4 : f32 to vector<128x128xf32>
    %11 = arith.select %9, %7, %10 : vector<128x128xi1>, vector<128x128xf32>
    %c0_5 = arith.constant 0 : index
    %c0_6 = arith.constant 0 : index
    %12 = vector.load %arg2[%c0_5, %c0_6] : memref<128x128xf32, #tpu.memory_space<vmem>>, vector<128x128xf32>
    tpu.vector_store %arg2[%c0_5, %c0_6], %11 {strides = array<i32>} : memref<128x128xf32, #tpu.memory_space<vmem>>, vector<128x128xf32>,
    return
  }
  func.func @transform_0(%arg0: i32) -> (i32, i32) {
    %c0_i32 = arith.constant 0 : i32
    %c0_i32_0 = arith.constant 0 : i32
    return %arg0, %c0_i32 : i32, i32
  }
  func.func @transform_1(%arg0: i32) -> (i32, i32) {
    %c0_i32 = arith.constant 0 : i32
    %c0_i32_0 = arith.constant 0 : i32
    return %arg0, %c0_i32 : i32, i32
  }
}

</mosaic_0001>

<llo_original>
// kernel: tpu_custom_call.1
$region0: #{tpu_custom_call.1}
  #allocation0 [shape = 'u32[]', space=smem, size = 0x4, offset = 0x4, fixed_abs, tag = 'smem constant byte address 0x4 - core index']
  #allocation1 [shape = 'u32[144,128]{1,0:T(1,128)}', space=vmem, size = 0x12000, scoped, tag = 'internal scratch']
  %s0 = inlined_call_operand.hbm [shape: f32[128,128], index: 0, kind: input, shape index: {}]
  %s1 = inlined_call_operand.hbm [shape: f32[128,128], index: 1, kind: output, shape index: {}]
  %s2 = sld [smem:[#allocation0]]
  $region18: #{tpu_custom_call.1} parent=0
    _
  %s4 = ssub.s32 1, %s2
  %s5 = scalar_select 0, %s4, %s2
  $region1: #{tpu_custom_call.1} parent=0
    #allocation2 [shape = 'u8[65536]{0}', space=vmem, size = 0x10000, scoped, tag = 'input window, operand 0, single buffered']
    #allocation3 [shape = 's32[1]{0}', space=sflag, size = 0x4, scoped, tag = 'scoped memory for tpu_custom_call.1']
    #allocation4 [shape = 's32[1]{0}', space=sflag, size = 0x4, scoped, tag = 'scoped memory for tpu_custom_call.1']
    #allocation5 [shape = 'u8[65536]{0}', space=vmem, size = 0x10000, scoped, tag = 'output window, operand 0, single buffered']
    %6 = vsyncpa [#allocation3], 0
    %7 = vsyncpa [#allocation4], 0
    // Predicated region
    $region2: #{tpu_custom_call.1} parent=1 // pred_check
      _
    $region3: #{tpu_custom_call.1} parent=1 // pred_check_branch
      %9 = sbr.rel (0) target = $region5
    $region4: #{tpu_custom_call.1} parent=1 // pred_region
      %s11 = ssub.s32 2048, 2048
      %12 = vsyncadd [#allocation3], %s11
      %s13 = sshll.u32 [#allocation2], 4
      %s14 = int_to_ptr.vmem [resolvable:$true] %s13
      %19 = dma.hbm_to_vmem [thread:$0]  %s0, 2048, %s14, [#allocation3], 128, 128, 8
    $region5: #{tpu_custom_call.1} parent=1 // pred_fallthru
      _
    // Predicated region
    $region6: #{tpu_custom_call.1} parent=1 // pred_check
      _
    $region7: #{tpu_custom_call.1} parent=1 // pred_check_branch
      %21 = sbr.rel (0) target = $region9
    $region8: #{tpu_custom_call.1} parent=1 // pred_region
      %22 = dma.done [#allocation3], 2048
    $region9: #{tpu_custom_call.1} parent=1 // pred_fallthru
      _
    %v23 = vld [vmem:[#allocation2] sm:$0xff]
    %v24 = vld [vmem:[#allocation2 + $0x8] sm:$0xff]
    %v25 = vld [vmem:[#allocation2 + $0x10] sm:$0xff]
    %v26 = vld [vmem:[#allocation2 + $0x18] sm:$0xff]
    %v27 = vld [vmem:[#allocation2 + $0x20] sm:$0xff]
    %v28 = vld [vmem:[#allocation2 + $0x28] sm:$0xff]
    %v29 = vld [vmem:[#allocation2 + $0x30] sm:$0xff]
    %v30 = vld [vmem:[#allocation2 + $0x38] sm:$0xff]
    %v31 = vld [vmem:[#allocation2 + $0x40] sm:$0xff]
    %v32 = vld [vmem:[#allocation2 + $0x48] sm:$0xff]
    %v33 = vld [vmem:[#allocation2 + $0x50] sm:$0xff]
    %v34 = vld [vmem:[#allocation2 + $0x58] sm:$0xff]
    %v35 = vld [vmem:[#allocation2 + $0x60] sm:$0xff]
    %v36 = vld [vmem:[#allocation2 + $0x68] sm:$0xff]
    %v37 = vld [vmem:[#allocation2 + $0x70] sm:$0xff]
    %v38 = vld [vmem:[#allocation2 + $0x78] sm:$0xff]
    %v39 = vmul.f32 %v23, 0.62831855
    %v40 = vmul.f32 %v24, 0.62831855
    %v41 = vmul.f32 %v25, 0.62831855
    %v42 = vmul.f32 %v26, 0.62831855
    %v43 = vmul.f32 %v27, 0.62831855
    %v44 = vmul.f32 %v28, 0.62831855
    %v45 = vmul.f32 %v29, 0.62831855
    %v46 = vmul.f32 %v30, 0.62831855
    %v47 = vmul.f32 %v31, 0.62831855
    %v48 = vmul.f32 %v32, 0.62831855
    %v49 = vmul.f32 %v33, 0.62831855
    %v50 = vmul.f32 %v34, 0.62831855
    %v51 = vmul.f32 %v35, 0.62831855
    %v52 = vmul.f32 %v36, 0.62831855
    %v53 = vmul.f32 %v37, 0.62831855
    %v54 = vmul.f32 %v38, 0.62831855
    %v55 = vand.u32 2147483647, %v39
    %vm56 = vcmp.le.f32.partialorder %v55, 0.7853982
    %vm57 = vcmp.lt.s32.totalorder %v39, 0
    %v58 = vand.u32 %v39, 2139095040
    %v59 = vshrl.u32 %v58, 23
    %v60 = vsub.s32 %v59, 127
    %v61 = vand.u32 2147483647, %v39
    %v62 = vand.u32 %v61, 8388607
    %v63 = vor.u32 %v62, 8388608
    %v64 = vsub.s32 0, %v63
    %v65 = vadd.s32 %v60, 1
    %vm66 = vcmp.gt.s32.totalorder %v65, 0
    %v67 = vsel %vm66, %v65, 0
    %v68 = vshrl.u32 %v67, 5
    %v69 = vand.u32 %v67, 31
    %v70 = vsub.s32 32, %v69
    %v71 = vshrl.u32 683565275, %v70
    %v72 = vshll.u32 683565275, %v69
    %v73 = vshrl.u32 2475754826, %v70
    %v74 = vor.u32 %v72, %v73
    %v75 = vshll.u32 2475754826, %v69
    %v76 = vshrl.u32 2131351028, %v70
    %v77 = vor.u32 %v75, %v76
    %v78 = vshll.u32 2131351028, %v69
    %v79 = vshrl.u32 2102212464, %v70
    %v80 = vor.u32 %v78, %v79
    %v81 = vshll.u32 2102212464, %v69
    %v82 = vshrl.u32 920167782, %v70
    %v83 = vor.u32 %v81, %v82
    %v84 = vshll.u32 920167782, %v69
    %v85 = vshrl.u32 1326507024, %v70
    %v86 = vor.u32 %v84, %v85
    %vm87 = vcmp.lt.s32.totalorder %v68, 1
    %vm88 = vcmp.lt.s32.totalorder %v68, 2
    %vm89 = vcmp.lt.s32.totalorder %v68, 3
    %vm90 = vcmp.lt.s32.totalorder %v68, 4
    %v91 = vsel %vm87, %v71, %v74
    %v92 = vsel %vm90, %v80, 2102212464
    %v93 = vsel %vm89, %v77, %v92
    %v94 = vsel %vm88, %v91, %v93
    %v95 = vsel %vm87, %v74, %v77
    %v96 = vsel %vm90, %v83, 920167782
    %v97 = vsel %vm89, %v80, %v96
    %v98 = vsel %vm88, %v95, %v97
    %v99 = vsel %vm87, %v77, %v80
    %v100 = vsel %vm90, %v86, 1326507024
    %v101 = vsel %vm89, %v83, %v100
    %v102 = vsel %vm88, %v99, %v101
    %v103 = vshll.u32 %v63, 8
    %v104 = vmul.u32.u64.compose %v103, %v102
    %v105 = vextract.low.u32 %v104
    %v106 = vextract.high.u32 %v104
    %v107 = vmul.u32.u64.compose %v103, %v98
    %v108 = vextract.low.u32 %v107
    %v109 = vextract.high.u32 %v107
    %v110 = vmul.u32 %v103, %v94
    %v111 = vadd.s32 %v106, %v108
    %vm112 = vc.u32 %v106, %v108
    %v113 = vadd.s32 %v109, 1
    %v114 = vsel %vm112, %v113, %v109
    %v115 = vadd.s32 %v110, %v114
    %v116 = vadd.s32 %v115, 536870912
    %v117 = vshrl.u32 %v116, 30
    %v118 = vshll.u32 %v117, 30
    %v119 = vsub.s32 %v115, %v118
    %vm120 = vcmp.lt.s32.totalorder %v119, 0
    %v121 = vsub.s32 0, %v119
    %v122 = vsel %vm120, %v121, %v119
    %v123 = vclz %v122
    %v124 = vsub.s32 %v123, 2
    %vm125 = vcmp.gt.s32.totalorder 0, %v124
    %v126 = vsel %vm125, 0, %v124
    %v127 = vsub.s32 32, %v126
    %v128 = vshll.u32 %v119, %v126
    %v129 = vshrl.u32 %v111, %v127
    %v130 = vor.u32 %v128, %v129
    %v131 = vsub.s32 4294967266, %v126
    %v132 = vadd.s32 %v131, 127
    %v133 = vshll.u32 %v132, 23
    %v134 = vor.u32 4788187, %v133
    %v135 = vand.u32 2147483647, %v134
    %v137 = vcvt.s32.f32 %v130
    %v138 = vmul.f32 %v137, %v135
    %v139 = vxor.u32 %v138, 2147483648
    %v140 = vsel %vm57, %v139, %v138
    %v141 = vsub.s32 4, %v117
    %v142 = vsel %vm57, %v141, %v117
    %v143 = vsel %vm56, %v39, %v140
    %v144 = vsel %vm56, 0, %v142
    %v145 = vcosq.f32.pop %v143
    %v146 = vsinq.f32.pop %v143
    %vm147 = vweird.f32 %v39
    %v148 = vand.u32 %v144, 3
    %vm149 = vcmp.lt.s32.totalorder %v148, 2
    %vm150 = vcmp.eq.s32.totalorder %v148, 0
    %v151 = vxor.u32 %v146, 2147483648
    %v152 = vsel %vm150, %v145, %v151
    %vm153 = vcmp.eq.s32.totalorder %v148, 2
    %v154 = vxor.u32 %v145, 2147483648
    %v155 = vsel %vm153, %v154, %v146
    %v156 = vsel %vm149, %v152, %v155
    %v157 = vsel %vm147, nan, %v156
    %v158 = vand.u32 2147483647, %v40
    %vm159 = vcmp.le.f32.partialorder %v158, 0.7853982
    %vm160 = vcmp.lt.s32.totalorder %v40, 0
    %v161 = vand.u32 %v40, 2139095040
    %v162 = vshrl.u32 %v161, 23
    %v163 = vsub.s32 %v162, 127
    %v164 = vand.u32 2147483647, %v40
    %v165 = vand.u32 %v164, 8388607
    %v166 = vor.u32 %v165, 8388608
    %v167 = vsub.s32 0, %v166
    %v168 = vadd.s32 %v163, 1
    %vm169 = vcmp.gt.s32.totalorder %v168, 0
    %v170 = vsel %vm169, %v168, 0
    %v171 = vshrl.u32 %v170, 5
    %v172 = vand.u32 %v170, 31
    %v173 = vsub.s32 32, %v172
    %v174 = vshrl.u32 683565275, %v173
    %v175 = vshll.u32 683565275, %v172
    %v176 = vshrl.u32 2475754826, %v173
    %v177 = vor.u32 %v175, %v176
    %v178 = vshll.u32 2475754826, %v172
    %v179 = vshrl.u32 2131351028, %v173
    %v180 = vor.u32 %v178, %v179
    %v181 = vshll.u32 2131351028, %v172
    %v182 = vshrl.u32 2102212464, %v173
    %v183 = vor.u32 %v181, %v182
    %v184 = vshll.u32 2102212464, %v172
    %v185 = vshrl.u32 920167782, %v173
    %v186 = vor.u32 %v184, %v185
    %v187 = vshll.u32 920167782, %v172
    %v188 = vshrl.u32 1326507024, %v173
    %v189 = vor.u32 %v187, %v188
    %vm190 = vcmp.lt.s32.totalorder %v171, 1
    %vm191 = vcmp.lt.s32.totalorder %v171, 2
    %vm192 = vcmp.lt.s32.totalorder %v171, 3
    %vm193 = vcmp.lt.s32.totalorder %v171, 4
    %v194 = vsel %vm190, %v174, %v177
    %v195 = vsel %vm193, %v183, 2102212464
    %v196 = vsel %vm192, %v180, %v195
    %v197 = vsel %vm191, %v194, %v196
    %v198 = vsel %vm190, %v177, %v180
    %v199 = vsel %vm193, %v186, 920167782
    %v200 = vsel %vm192, %v183, %v199
    %v201 = vsel %vm191, %v198, %v200
    %v202 = vsel %vm190, %v180, %v183
    %v203 = vsel %vm193, %v189, 1326507024
    %v204 = vsel %vm192, %v186, %v203
    %v205 = vsel %vm191, %v202, %v204
    %v206 = vshll.u32 %v166, 8
    %v207 = vmul.u32.u64.compose %v206, %v205
    %v208 = vextract.low.u32 %v207
    %v209 = vextract.high.u32 %v207
    %v210 = vmul.u32.u64.compose %v206, %v201
    %v211 = vextract.low.u32 %v210
    %v212 = vextract.high.u32 %v210
    %v213 = vmul.u32 %v206, %v197
    %v214 = vadd.s32 %v209, %v211
    %vm215 = vc.u32 %v209, %v211
    %v216 = vadd.s32 %v212, 1
    %v217 = vsel %vm215, %v216, %v212
    %v218 = vadd.s32 %v213, %v217
    %v219 = vadd.s32 %v218, 536870912
    %v220 = vshrl.u32 %v219, 30
    %v221 = vshll.u32 %v220, 30
    %v222 = vsub.s32 %v218, %v221
    %vm223 = vcmp.lt.s32.totalorder %v222, 0
    %v224 = vsub.s32 0, %v222
    %v225 = vsel %vm223, %v224, %v222
    %v226 = vclz %v225
    %v227 = vsub.s32 %v226, 2
    %vm228 = vcmp.gt.s32.totalorder 0, %v227
    %v229 = vsel %vm228, 0, %v227
    %v230 = vsub.s32 32, %v229
    %v231 = vshll.u32 %v222, %v229
    %v232 = vshrl.u32 %v214, %v230
    %v233 = vor.u32 %v231, %v232
    %v234 = vsub.s32 4294967266, %v229
    %v235 = vadd.s32 %v234, 127
    %v236 = vshll.u32 %v235, 23
    %v237 = vor.u32 4788187, %v236
    %v238 = vand.u32 2147483647, %v237
    %v240 = vcvt.s32.f32 %v233
    %v241 = vmul.f32 %v240, %v238
    %v242 = vxor.u32 %v241, 2147483648
    %v243 = vsel %vm160, %v242, %v241
    %v244 = vsub.s32 4, %v220
    %v245 = vsel %vm160, %v244, %v220
    %v246 = vsel %vm159, %v40, %v243
    %v247 = vsel %vm159, 0, %v245
    %v248 = vcosq.f32.pop %v246
    %v249 = vsinq.f32.pop %v246
    %vm250 = vweird.f32 %v40
    %v251 = vand.u32 %v247, 3
    %vm252 = vcmp.lt.s32.totalorder %v251, 2
    %vm253 = vcmp.eq.s32.totalorder %v251, 0
    %v254 = vxor.u32 %v249, 2147483648
    %v255 = vsel %vm253, %v248, %v254
    %vm256 = vcmp.eq.s32.totalorder %v251, 2
    %v257 = vxor.u32 %v248, 2147483648
    %v258 = vsel %vm256, %v257, %v249
    %v259 = vsel %vm252, %v255, %v258
    %v260 = vsel %vm250, nan, %v259
    %v261 = vand.u32 2147483647, %v41
    %vm262 = vcmp.le.f32.partialorder %v261, 0.7853982
    %vm263 = vcmp.lt.s32.totalorder %v41, 0
    %v264 = vand.u32 %v41, 2139095040
    %v265 = vshrl.u32 %v264, 23
    %v266 = vsub.s32 %v265, 127
    %v267 = vand.u32 2147483647, %v41
    %v268 = vand.u32 %v267, 8388607
    %v269 = vor.u32 %v268, 8388608
    %v270 = vsub.s32 0, %v269
    %v271 = vadd.s32 %v266, 1
    %vm272 = vcmp.gt.s32.totalorder %v271, 0
    %v273 = vsel %vm272, %v271, 0
    %v274 = vshrl.u32 %v273, 5
    %v275 = vand.u32 %v273, 31
    %v276 = vsub.s32 32, %v275
    %v277 = vshrl.u32 683565275, %v276
    %v278 = vshll.u32 683565275, %v275
    %v279 = vshrl.u32 2475754826, %v276
    %v280 = vor.u32 %v278, %v279
    %v281 = vshll.u32 2475754826, %v275
    %v282 = vshrl.u32 2131351028, %v276
    %v283 = vor.u32 %v281, %v282
    %v284 = vshll.u32 2131351028, %v275
    %v285 = vshrl.u32 2102212464, %v276
    %v286 = vor.u32 %v284, %v285
    %v287 = vshll.u32 2102212464, %v275
    %v288 = vshrl.u32 920167782, %v276
    %v289 = vor.u32 %v287, %v288
    %v290 = vshll.u32 920167782, %v275
    %v291 = vshrl.u32 1326507024, %v276
    %v292 = vor.u32 %v290, %v291
    %vm293 = vcmp.lt.s32.totalorder %v274, 1
    %vm294 = vcmp.lt.s32.totalorder %v274, 2
    %vm295 = vcmp.lt.s32.totalorder %v274, 3
    %vm296 = vcmp.lt.s32.totalorder %v274, 4
    %v297 = vsel %vm293, %v277, %v280
    %v298 = vsel %vm296, %v286, 2102212464
    %v299 = vsel %vm295, %v283, %v298
    %v300 = vsel %vm294, %v297, %v299
    %v301 = vsel %vm293, %v280, %v283
    %v302 = vsel %vm296, %v289, 920167782
    %v303 = vsel %vm295, %v286, %v302
    %v304 = vsel %vm294, %v301, %v303
    %v305 = vsel %vm293, %v283, %v286
    %v306 = vsel %vm296, %v292, 1326507024
    %v307 = vsel %vm295, %v289, %v306
    %v308 = vsel %vm294, %v305, %v307
    %v309 = vshll.u32 %v269, 8
    %v310 = vmul.u32.u64.compose %v309, %v308
    %v311 = vextract.low.u32 %v310
    %v312 = vextract.high.u32 %v310
    %v313 = vmul.u32.u64.compose %v309, %v304
    %v314 = vextract.low.u32 %v313
    %v315 = vextract.high.u32 %v313
    %v316 = vmul.u32 %v309, %v300
    %v317 = vadd.s32 %v312, %v314
    %vm318 = vc.u32 %v312, %v314
    %v319 = vadd.s32 %v315, 1
    %v320 = vsel %vm318, %v319, %v315
    %v321 = vadd.s32 %v316, %v320
    %v322 = vadd.s32 %v321, 536870912
    %v323 = vshrl.u32 %v322, 30
    %v324 = vshll.u32 %v323, 30
    %v325 = vsub.s32 %v321, %v324
    %vm326 = vcmp.lt.s32.totalorder %v325, 0
    %v327 = vsub.s32 0, %v325
    %v328 = vsel %vm326, %v327, %v325
    %v329 = vclz %v328
    %v330 = vsub.s32 %v329, 2
    %vm331 = vcmp.gt.s32.totalorder 0, %v330
    %v332 = vsel %vm331, 0, %v330
    %v333 = vsub.s32 32, %v332
    %v334 = vshll.u32 %v325, %v332
    %v335 = vshrl.u32 %v317, %v333
    %v336 = vor.u32 %v334, %v335
    %v337 = vsub.s32 4294967266, %v332
    %v338 = vadd.s32 %v337, 127
    %v339 = vshll.u32 %v338, 23
    %v340 = vor.u32 4788187, %v339
    %v341 = vand.u32 2147483647, %v340
    %v343 = vcvt.s32.f32 %v336
    %v344 = vmul.f32 %v343, %v341
    %v345 = vxor.u32 %v344, 2147483648
    %v346 = vsel %vm263, %v345, %v344
    %v347 = vsub.s32 4, %v323
    %v348 = vsel %vm263, %v347, %v323
    %v349 = vsel %vm262, %v41, %v346
    %v350 = vsel %vm262, 0, %v348
    %v351 = vcosq.f32.pop %v349
    %v352 = vsinq.f32.pop %v349
    %vm353 = vweird.f32 %v41
    %v354 = vand.u32 %v350, 3
    %vm355 = vcmp.lt.s32.totalorder %v354, 2
    %vm356 = vcmp.eq.s32.totalorder %v354, 0
    %v357 = vxor.u32 %v352, 2147483648
    %v358 = vsel %vm356, %v351, %v357
    %vm359 = vcmp.eq.s32.totalorder %v354, 2
    %v360 = vxor.u32 %v351, 2147483648
    %v361 = vsel %vm359, %v360, %v352
    %v362 = vsel %vm355, %v358, %v361
    %v363 = vsel %vm353, nan, %v362
    %v364 = vand.u32 2147483647, %v42
    %vm365 = vcmp.le.f32.partialorder %v364, 0.7853982
    %vm366 = vcmp.lt.s32.totalorder %v42, 0
    %v367 = vand.u32 %v42, 2139095040
    %v368 = vshrl.u32 %v367, 23
    %v369 = vsub.s32 %v368, 127
    %v370 = vand.u32 2147483647, %v42
    %v371 = vand.u32 %v370, 8388607
    %v372 = vor.u32 %v371, 8388608
    %v373 = vsub.s32 0, %v372
    %v374 = vadd.s32 %v369, 1
    %vm375 = vcmp.gt.s32.totalorder %v374, 0
    %v376 = vsel %vm375, %v374, 0
    %v377 = vshrl.u32 %v376, 5
    %v378 = vand.u32 %v376, 31
    %v379 = vsub.s32 32, %v378
    %v380 = vshrl.u32 683565275, %v379
    %v381 = vshll.u32 683565275, %v378
    %v382 = vshrl.u32 2475754826, %v379
    %v383 = vor.u32 %v381, %v382
    %v384 = vshll.u32 2475754826, %v378
    %v385 = vshrl.u32 2131351028, %v379
    %v386 = vor.u32 %v384, %v385
    %v387 = vshll.u32 2131351028, %v378
    %v388 = vshrl.u32 2102212464, %v379
    %v389 = vor.u32 %v387, %v388
    %v390 = vshll.u32 2102212464, %v378
    %v391 = vshrl.u32 920167782, %v379
    %v392 = vor.u32 %v390, %v391
    %v393 = vshll.u32 920167782, %v378
    %v394 = vshrl.u32 1326507024, %v379
    %v395 = vor.u32 %v393, %v394
    %vm396 = vcmp.lt.s32.totalorder %v377, 1
    %vm397 = vcmp.lt.s32.totalorder %v377, 2
    %vm398 = vcmp.lt.s32.totalorder %v377, 3
    %vm399 = vcmp.lt.s32.totalorder %v377, 4
    %v400 = vsel %vm396, %v380, %v383
    %v401 = vsel %vm399, %v389, 2102212464
    %v402 = vsel %vm398, %v386, %v401
    %v403 = vsel %vm397, %v400, %v402
    %v404 = vsel %vm396, %v383, %v386
    %v405 = vsel %vm399, %v392, 920167782
    %v406 = vsel %vm398, %v389, %v405
    %v407 = vsel %vm397, %v404, %v406
    %v408 = vsel %vm396, %v386, %v389
    %v409 = vsel %vm399, %v395, 1326507024
    %v410 = vsel %vm398, %v392, %v409
    %v411 = vsel %vm397, %v408, %v410
    %v412 = vshll.u32 %v372, 8
    %v413 = vmul.u32.u64.compose %v412, %v411
    %v414 = vextract.low.u32 %v413
    %v415 = vextract.high.u32 %v413
    %v416 = vmul.u32.u64.compose %v412, %v407
    %v417 = vextract.low.u32 %v416
    %v418 = vextract.high.u32 %v416
    %v419 = vmul.u32 %v412, %v403
    %v420 = vadd.s32 %v415, %v417
    %vm421 = vc.u32 %v415, %v417
    %v422 = vadd.s32 %v418, 1
    %v423 = vsel %vm421, %v422, %v418
    %v424 = vadd.s32 %v419, %v423
    %v425 = vadd.s32 %v424, 536870912
    %v426 = vshrl.u32 %v425, 30
    %v427 = vshll.u32 %v426, 30
    %v428 = vsub.s32 %v424, %v427
    %vm429 = vcmp.lt.s32.totalorder %v428, 0
    %v430 = vsub.s32 0, %v428
    %v431 = vsel %vm429, %v430, %v428
    %v432 = vclz %v431
    %v433 = vsub.s32 %v432, 2
    %vm434 = vcmp.gt.s32.totalorder 0, %v433
    %v435 = vsel %vm434, 0, %v433
    %v436 = vsub.s32 32, %v435
    %v437 = vshll.u32 %v428, %v435
    %v438 = vshrl.u32 %v420, %v436
    %v439 = vor.u32 %v437, %v438
    %v440 = vsub.s32 4294967266, %v435
    %v441 = vadd.s32 %v440, 127
    %v442 = vshll.u32 %v441, 23
    %v443 = vor.u32 4788187, %v442
    %v444 = vand.u32 2147483647, %v443
    %v446 = vcvt.s32.f32 %v439
    %v447 = vmul.f32 %v446, %v444
    %v448 = vxor.u32 %v447, 2147483648
    %v449 = vsel %vm366, %v448, %v447
    %v450 = vsub.s32 4, %v426
    %v451 = vsel %vm366, %v450, %v426
    %v452 = vsel %vm365, %v42, %v449
    %v453 = vsel %vm365, 0, %v451
    %v454 = vcosq.f32.pop %v452
    %v455 = vsinq.f32.pop %v452
    %vm456 = vweird.f32 %v42
    %v457 = vand.u32 %v453, 3
    %vm458 = vcmp.lt.s32.totalorder %v457, 2
    %vm459 = vcmp.eq.s32.totalorder %v457, 0
    %v460 = vxor.u32 %v455, 2147483648
    %v461 = vsel %vm459, %v454, %v460
    %vm462 = vcmp.eq.s32.totalorder %v457, 2
    %v463 = vxor.u32 %v454, 2147483648
    %v464 = vsel %vm462, %v463, %v455
    %v465 = vsel %vm458, %v461, %v464
    %v466 = vsel %vm456, nan, %v465
    %v467 = vand.u32 2147483647, %v43
    %vm468 = vcmp.le.f32.partialorder %v467, 0.7853982
    %vm469 = vcmp.lt.s32.totalorder %v43, 0
    %v470 = vand.u32 %v43, 2139095040
    %v471 = vshrl.u32 %v470, 23
    %v472 = vsub.s32 %v471, 127
    %v473 = vand.u32 2147483647, %v43
    %v474 = vand.u32 %v473, 8388607
    %v475 = vor.u32 %v474, 8388608
    %v476 = vsub.s32 0, %v475
    %v477 = vadd.s32 %v472, 1
    %vm478 = vcmp.gt.s32.totalorder %v477, 0
    %v479 = vsel %vm478, %v477, 0
    %v480 = vshrl.u32 %v479, 5
    %v481 = vand.u32 %v479, 31
    %v482 = vsub.s32 32, %v481
    %v483 = vshrl.u32 683565275, %v482
    %v484 = vshll.u32 683565275, %v481
    %v485 = vshrl.u32 2475754826, %v482
    %v486 = vor.u32 %v484, %v485
    %v487 = vshll.u32 2475754826, %v481
    %v488 = vshrl.u32 2131351028, %v482
    %v489 = vor.u32 %v487, %v488
    %v490 = vshll.u32 2131351028, %v481
    %v491 = vshrl.u32 2102212464, %v482
    %v492 = vor.u32 %v490, %v491
    %v493 = vshll.u32 2102212464, %v481
    %v494 = vshrl.u32 920167782, %v482
    %v495 = vor.u32 %v493, %v494
    %v496 = vshll.u32 920167782, %v481
    %v497 = vshrl.u32 1326507024, %v482
    %v498 = vor.u32 %v496, %v497
    %vm499 = vcmp.lt.s32.totalorder %v480, 1
    %vm500 = vcmp.lt.s32.totalorder %v480, 2
    %vm501 = vcmp.lt.s32.totalorder %v480, 3
    %vm502 = vcmp.lt.s32.totalorder %v480, 4
    %v503 = vsel %vm499, %v483, %v486
    %v504 = vsel %vm502, %v492, 2102212464
    %v505 = vsel %vm501, %v489, %v504
    %v506 = vsel %vm500, %v503, %v505
    %v507 = vsel %vm499, %v486, %v489
    %v508 = vsel %vm502, %v495, 920167782
    %v509 = vsel %vm501, %v492, %v508
    %v510 = vsel %vm500, %v507, %v509
    %v511 = vsel %vm499, %v489, %v492
    %v512 = vsel %vm502, %v498, 1326507024
    %v513 = vsel %vm501, %v495, %v512
    %v514 = vsel %vm500, %v511, %v513
    %v515 = vshll.u32 %v475, 8
    %v516 = vmul.u32.u64.compose %v515, %v514
    %v517 = vextract.low.u32 %v516
    %v518 = vextract.high.u32 %v516
    %v519 = vmul.u32.u64.compose %v515, %v510
    %v520 = vextract.low.u32 %v519
    %v521 = vextract.high.u32 %v519
    %v522 = vmul.u32 %v515, %v506
    %v523 = vadd.s32 %v518, %v520
    %vm524 = vc.u32 %v518, %v520
    %v525 = vadd.s32 %v521, 1
    %v526 = vsel %vm524, %v525, %v521
    %v527 = vadd.s32 %v522, %v526
    %v528 = vadd.s32 %v527, 536870912
    %v529 = vshrl.u32 %v528, 30
    %v530 = vshll.u32 %v529, 30
    %v531 = vsub.s32 %v527, %v530
    %vm532 = vcmp.lt.s32.totalorder %v531, 0
    %v533 = vsub.s32 0, %v531
    %v534 = vsel %vm532, %v533, %v531
    %v535 = vclz %v534
    %v536 = vsub.s32 %v535, 2
    %vm537 = vcmp.gt.s32.totalorder 0, %v536
    %v538 = vsel %vm537, 0, %v536
    %v539 = vsub.s32 32, %v538
    %v540 = vshll.u32 %v531, %v538
    %v541 = vshrl.u32 %v523, %v539
    %v542 = vor.u32 %v540, %v541
    %v543 = vsub.s32 4294967266, %v538
    %v544 = vadd.s32 %v543, 127
    %v545 = vshll.u32 %v544, 23
    %v546 = vor.u32 4788187, %v545
    %v547 = vand.u32 2147483647, %v546
    %v549 = vcvt.s32.f32 %v542
    %v550 = vmul.f32 %v549, %v547
    %v551 = vxor.u32 %v550, 2147483648
    %v552 = vsel %vm469, %v551, %v550
    %v553 = vsub.s32 4, %v529
    %v554 = vsel %vm469, %v553, %v529
    %v555 = vsel %vm468, %v43, %v552
    %v556 = vsel %vm468, 0, %v554
    %v557 = vcosq.f32.pop %v555
    %v558 = vsinq.f32.pop %v555
    %vm559 = vweird.f32 %v43
    %v560 = vand.u32 %v556, 3
    %vm561 = vcmp.lt.s32.totalorder %v560, 2
    %vm562 = vcmp.eq.s32.totalorder %v560, 0
    %v563 = vxor.u32 %v558, 2147483648
    %v564 = vsel %vm562, %v557, %v563
    %vm565 = vcmp.eq.s32.totalorder %v560, 2
    %v566 = vxor.u32 %v557, 2147483648
    %v567 = vsel %vm565, %v566, %v558
    %v568 = vsel %vm561, %v564, %v567
    %v569 = vsel %vm559, nan, %v568
    %v570 = vand.u32 2147483647, %v44
    %vm571 = vcmp.le.f32.partialorder %v570, 0.7853982
    %vm572 = vcmp.lt.s32.totalorder %v44, 0
    %v573 = vand.u32 %v44, 2139095040
    %v574 = vshrl.u32 %v573, 23
    %v575 = vsub.s32 %v574, 127
    %v576 = vand.u32 2147483647, %v44
    %v577 = vand.u32 %v576, 8388607
    %v578 = vor.u32 %v577, 8388608
    %v579 = vsub.s32 0, %v578
    %v580 = vadd.s32 %v575, 1
    %vm581 = vcmp.gt.s32.totalorder %v580, 0
    %v582 = vsel %vm581, %v580, 0
    %v583 = vshrl.u32 %v582, 5
    %v584 = vand.u32 %v582, 31
    %v585 = vsub.s32 32, %v584
    %v586 = vshrl.u32 683565275, %v585
    %v587 = vshll.u32 683565275, %v584
    %v588 = vshrl.u32 2475754826, %v585
    %v589 = vor.u32 %v587, %v588
    %v590 = vshll.u32 2475754826, %v584
    %v591 = vshrl.u32 2131351028, %v585
    %v592 = vor.u32 %v590, %v591
    %v593 = vshll.u32 2131351028, %v584
    %v594 = vshrl.u32 2102212464, %v585
    %v595 = vor.u32 %v593, %v594
    %v596 = vshll.u32 2102212464, %v584
    %v597 = vshrl.u32 920167782, %v585
    %v598 = vor.u32 %v596, %v597
    %v599 = vshll.u32 920167782, %v584
    %v600 = vshrl.u32 1326507024, %v585
    %v601 = vor.u32 %v599, %v600
    %vm602 = vcmp.lt.s32.totalorder %v583, 1
    %vm603 = vcmp.lt.s32.totalorder %v583, 2
    %vm604 = vcmp.lt.s32.totalorder %v583, 3
    %vm605 = vcmp.lt.s32.totalorder %v583, 4
    %v606 = vsel %vm602, %v586, %v589
    %v607 = vsel %vm605, %v595, 2102212464
    %v608 = vsel %vm604, %v592, %v607
    %v609 = vsel %vm603, %v606, %v608
    %v610 = vsel %vm602, %v589, %v592
    %v611 = vsel %vm605, %v598, 920167782
    %v612 = vsel %vm604, %v595, %v611
    %v613 = vsel %vm603, %v610, %v612
    %v614 = vsel %vm602, %v592, %v595
    %v615 = vsel %vm605, %v601, 1326507024
    %v616 = vsel %vm604, %v598, %v615
    %v617 = vsel %vm603, %v614, %v616
    %v618 = vshll.u32 %v578, 8
    %v619 = vmul.u32.u64.compose %v618, %v617
    %v620 = vextract.low.u32 %v619
    %v621 = vextract.high.u32 %v619
    %v622 = vmul.u32.u64.compose %v618, %v613
    %v623 = vextract.low.u32 %v622
    %v624 = vextract.high.u32 %v622
    %v625 = vmul.u32 %v618, %v609
    %v626 = vadd.s32 %v621, %v623
    %vm627 = vc.u32 %v621, %v623
    %v628 = vadd.s32 %v624, 1
    %v629 = vsel %vm627, %v628, %v624
    %v630 = vadd.s32 %v625, %v629
    %v631 = vadd.s32 %v630, 536870912
    %v632 = vshrl.u32 %v631, 30
    %v633 = vshll.u32 %v632, 30
    %v634 = vsub.s32 %v630, %v633
    %vm635 = vcmp.lt.s32.totalorder %v634, 0
    %v636 = vsub.s32 0, %v634
    %v637 = vsel %vm635, %v636, %v634
    %v638 = vclz %v637
    %v639 = vsub.s32 %v638, 2
    %vm640 = vcmp.gt.s32.totalorder 0, %v639
    %v641 = vsel %vm640, 0, %v639
    %v642 = vsub.s32 32, %v641
    %v643 = vshll.u32 %v634, %v641
    %v644 = vshrl.u32 %v626, %v642
    %v645 = vor.u32 %v643, %v644
    %v646 = vsub.s32 4294967266, %v641
    %v647 = vadd.s32 %v646, 127
    %v648 = vshll.u32 %v647, 23
    %v649 = vor.u32 4788187, %v648
    %v650 = vand.u32 2147483647, %v649
    %v652 = vcvt.s32.f32 %v645
    %v653 = vmul.f32 %v652, %v650
    %v654 = vxor.u32 %v653, 2147483648
    %v655 = vsel %vm572, %v654, %v653
    %v656 = vsub.s32 4, %v632
    %v657 = vsel %vm572, %v656, %v632
    %v658 = vsel %vm571, %v44, %v655
    %v659 = vsel %vm571, 0, %v657
    %v660 = vcosq.f32.pop %v658
    %v661 = vsinq.f32.pop %v658
    %vm662 = vweird.f32 %v44
    %v663 = vand.u32 %v659, 3
    %vm664 = vcmp.lt.s32.totalorder %v663, 2
    %vm665 = vcmp.eq.s32.totalorder %v663, 0
    %v666 = vxor.u32 %v661, 2147483648
    %v667 = vsel %vm665, %v660, %v666
    %vm668 = vcmp.eq.s32.totalorder %v663, 2
    %v669 = vxor.u32 %v660, 2147483648
    %v670 = vsel %vm668, %v669, %v661
    %v671 = vsel %vm664, %v667, %v670
    %v672 = vsel %vm662, nan, %v671
    %v673 = vand.u32 2147483647, %v45
    %vm674 = vcmp.le.f32.partialorder %v673, 0.7853982
    %vm675 = vcmp.lt.s32.totalorder %v45, 0
    %v676 = vand.u32 %v45, 2139095040
    %v677 = vshrl.u32 %v676, 23
    %v678 = vsub.s32 %v677, 127
    %v679 = vand.u32 2147483647, %v45
    %v680 = vand.u32 %v679, 8388607
    %v681 = vor.u32 %v680, 8388608
    %v682 = vsub.s32 0, %v681
    %v683 = vadd.s32 %v678, 1
    %vm684 = vcmp.gt.s32.totalorder %v683, 0
    %v685 = vsel %vm684, %v683, 0
    %v686 = vshrl.u32 %v685, 5
    %v687 = vand.u32 %v685, 31
    %v688 = vsub.s32 32, %v687
    %v689 = vshrl.u32 683565275, %v688
    %v690 = vshll.u32 683565275, %v687
    %v691 = vshrl.u32 2475754826, %v688
    %v692 = vor.u32 %v690, %v691
    %v693 = vshll.u32 2475754826, %v687
    %v694 = vshrl.u32 2131351028, %v688
    %v695 = vor.u32 %v693, %v694
    %v696 = vshll.u32 2131351028, %v687
    %v697 = vshrl.u32 2102212464, %v688
    %v698 = vor.u32 %v696, %v697
    %v699 = vshll.u32 2102212464, %v687
    %v700 = vshrl.u32 920167782, %v688
    %v701 = vor.u32 %v699, %v700
    %v702 = vshll.u32 920167782, %v687
    %v703 = vshrl.u32 1326507024, %v688
    %v704 = vor.u32 %v702, %v703
    %vm705 = vcmp.lt.s32.totalorder %v686, 1
    %vm706 = vcmp.lt.s32.totalorder %v686, 2
    %vm707 = vcmp.lt.s32.totalorder %v686, 3
    %vm708 = vcmp.lt.s32.totalorder %v686, 4
    %v709 = vsel %vm705, %v689, %v692
    %v710 = vsel %vm708, %v698, 2102212464
    %v711 = vsel %vm707, %v695, %v710
    %v712 = vsel %vm706, %v709, %v711
    %v713 = vsel %vm705, %v692, %v695
    %v714 = vsel %vm708, %v701, 920167782
    %v715 = vsel %vm707, %v698, %v714
    %v716 = vsel %vm706, %v713, %v715
    %v717 = vsel %vm705, %v695, %v698
    %v718 = vsel %vm708, %v704, 1326507024
    %v719 = vsel %vm707, %v701, %v718
    %v720 = vsel %vm706, %v717, %v719
    %v721 = vshll.u32 %v681, 8
    %v722 = vmul.u32.u64.compose %v721, %v720
    %v723 = vextract.low.u32 %v722
    %v724 = vextract.high.u32 %v722
    %v725 = vmul.u32.u64.compose %v721, %v716
    %v726 = vextract.low.u32 %v725
    %v727 = vextract.high.u32 %v725
    %v728 = vmul.u32 %v721, %v712
    %v729 = vadd.s32 %v724, %v726
    %vm730 = vc.u32 %v724, %v726
    %v731 = vadd.s32 %v727, 1
    %v732 = vsel %vm730, %v731, %v727
    %v733 = vadd.s32 %v728, %v732
    %v734 = vadd.s32 %v733, 536870912
    %v735 = vshrl.u32 %v734, 30
    %v736 = vshll.u32 %v735, 30
    %v737 = vsub.s32 %v733, %v736
    %vm738 = vcmp.lt.s32.totalorder %v737, 0
    %v739 = vsub.s32 0, %v737
    %v740 = vsel %vm738, %v739, %v737
    %v741 = vclz %v740
    %v742 = vsub.s32 %v741, 2
    %vm743 = vcmp.gt.s32.totalorder 0, %v742
    %v744 = vsel %vm743, 0, %v742
    %v745 = vsub.s32 32, %v744
    %v746 = vshll.u32 %v737, %v744
    %v747 = vshrl.u32 %v729, %v745
    %v748 = vor.u32 %v746, %v747
    %v749 = vsub.s32 4294967266, %v744
    %v750 = vadd.s32 %v749, 127
    %v751 = vshll.u32 %v750, 23
    %v752 = vor.u32 4788187, %v751
    %v753 = vand.u32 2147483647, %v752
    %v755 = vcvt.s32.f32 %v748
    %v756 = vmul.f32 %v755, %v753
    %v757 = vxor.u32 %v756, 2147483648
    %v758 = vsel %vm675, %v757, %v756
    %v759 = vsub.s32 4, %v735
    %v760 = vsel %vm675, %v759, %v735
    %v761 = vsel %vm674, %v45, %v758
    %v762 = vsel %vm674, 0, %v760
    %v763 = vcosq.f32.pop %v761
    %v764 = vsinq.f32.pop %v761
    %vm765 = vweird.f32 %v45
    %v766 = vand.u32 %v762, 3
    %vm767 = vcmp.lt.s32.totalorder %v766, 2
    %vm768 = vcmp.eq.s32.totalorder %v766, 0
    %v769 = vxor.u32 %v764, 2147483648
    %v770 = vsel %vm768, %v763, %v769
    %vm771 = vcmp.eq.s32.totalorder %v766, 2
    %v772 = vxor.u32 %v763, 2147483648
    %v773 = vsel %vm771, %v772, %v764
    %v774 = vsel %vm767, %v770, %v773
    %v775 = vsel %vm765, nan, %v774
    %v776 = vand.u32 2147483647, %v46
    %vm777 = vcmp.le.f32.partialorder %v776, 0.7853982
    %vm778 = vcmp.lt.s32.totalorder %v46, 0
    %v779 = vand.u32 %v46, 2139095040
    %v780 = vshrl.u32 %v779, 23
    %v781 = vsub.s32 %v780, 127
    %v782 = vand.u32 2147483647, %v46
    %v783 = vand.u32 %v782, 8388607
    %v784 = vor.u32 %v783, 8388608
    %v785 = vsub.s32 0, %v784
    %v786 = vadd.s32 %v781, 1
    %vm787 = vcmp.gt.s32.totalorder %v786, 0
    %v788 = vsel %vm787, %v786, 0
    %v789 = vshrl.u32 %v788, 5
    %v790 = vand.u32 %v788, 31
    %v791 = vsub.s32 32, %v790
    %v792 = vshrl.u32 683565275, %v791
    %v793 = vshll.u32 683565275, %v790
    %v794 = vshrl.u32 2475754826, %v791
    %v795 = vor.u32 %v793, %v794
    %v796 = vshll.u32 2475754826, %v790
    %v797 = vshrl.u32 2131351028, %v791
    %v798 = vor.u32 %v796, %v797
    %v799 = vshll.u32 2131351028, %v790
    %v800 = vshrl.u32 2102212464, %v791
    %v801 = vor.u32 %v799, %v800
    %v802 = vshll.u32 2102212464, %v790
    %v803 = vshrl.u32 920167782, %v791
    %v804 = vor.u32 %v802, %v803
    %v805 = vshll.u32 920167782, %v790
    %v806 = vshrl.u32 1326507024, %v791
    %v807 = vor.u32 %v805, %v806
    %vm808 = vcmp.lt.s32.totalorder %v789, 1
    %vm809 = vcmp.lt.s32.totalorder %v789, 2
    %vm810 = vcmp.lt.s32.totalorder %v789, 3
    %vm811 = vcmp.lt.s32.totalorder %v789, 4
    %v812 = vsel %vm808, %v792, %v795
    %v813 = vsel %vm811, %v801, 2102212464
    %v814 = vsel %vm810, %v798, %v813
    %v815 = vsel %vm809, %v812, %v814
    %v816 = vsel %vm808, %v795, %v798
    %v817 = vsel %vm811, %v804, 920167782
    %v818 = vsel %vm810, %v801, %v817
    %v819 = vsel %vm809, %v816, %v818
    %v820 = vsel %vm808, %v798, %v801
    %v821 = vsel %vm811, %v807, 1326507024
    %v822 = vsel %vm810, %v804, %v821
    %v823 = vsel %vm809, %v820, %v822
    %v824 = vshll.u32 %v784, 8
    %v825 = vmul.u32.u64.compose %v824, %v823
    %v826 = vextract.low.u32 %v825
    %v827 = vextract.high.u32 %v825
    %v828 = vmul.u32.u64.compose %v824, %v819
    %v829 = vextract.low.u32 %v828
    %v830 = vextract.high.u32 %v828
    %v831 = vmul.u32 %v824, %v815
    %v832 = vadd.s32 %v827, %v829
    %vm833 = vc.u32 %v827, %v829
    %v834 = vadd.s32 %v830, 1
    %v835 = vsel %vm833, %v834, %v830
    %v836 = vadd.s32 %v831, %v835
    %v837 = vadd.s32 %v836, 536870912
    %v838 = vshrl.u32 %v837, 30
    %v839 = vshll.u32 %v838, 30
    %v840 = vsub.s32 %v836, %v839
    %vm841 = vcmp.lt.s32.totalorder %v840, 0
    %v842 = vsub.s32 0, %v840
    %v843 = vsel %vm841, %v842, %v840
    %v844 = vclz %v843
    %v845 = vsub.s32 %v844, 2
    %vm846 = vcmp.gt.s32.totalorder 0, %v845
    %v847 = vsel %vm846, 0, %v845
    %v848 = vsub.s32 32, %v847
    %v849 = vshll.u32 %v840, %v847
    %v850 = vshrl.u32 %v832, %v848
    %v851 = vor.u32 %v849, %v850
    %v852 = vsub.s32 4294967266, %v847
    %v853 = vadd.s32 %v852, 127
    %v854 = vshll.u32 %v853, 23
    %v855 = vor.u32 4788187, %v854
    %v856 = vand.u32 2147483647, %v855
    %v858 = vcvt.s32.f32 %v851
    %v859 = vmul.f32 %v858, %v856
    %v860 = vxor.u32 %v859, 2147483648
    %v861 = vsel %vm778, %v860, %v859
    %v862 = vsub.s32 4, %v838
    %v863 = vsel %vm778, %v862, %v838
    %v864 = vsel %vm777, %v46, %v861
    %v865 = vsel %vm777, 0, %v863
    %v866 = vcosq.f32.pop %v864
    %v867 = vsinq.f32.pop %v864
    %vm868 = vweird.f32 %v46
    %v869 = vand.u32 %v865, 3
    %vm870 = vcmp.lt.s32.totalorder %v869, 2
    %vm871 = vcmp.eq.s32.totalorder %v869, 0
    %v872 = vxor.u32 %v867, 2147483648
    %v873 = vsel %vm871, %v866, %v872
    %vm874 = vcmp.eq.s32.totalorder %v869, 2
    %v875 = vxor.u32 %v866, 2147483648
    %v876 = vsel %vm874, %v875, %v867
    %v877 = vsel %vm870, %v873, %v876
    %v878 = vsel %vm868, nan, %v877
    %v879 = vand.u32 2147483647, %v47
    %vm880 = vcmp.le.f32.partialorder %v879, 0.7853982
    %vm881 = vcmp.lt.s32.totalorder %v47, 0
    %v882 = vand.u32 %v47, 2139095040
    %v883 = vshrl.u32 %v882, 23
    %v884 = vsub.s32 %v883, 127
    %v885 = vand.u32 2147483647, %v47
    %v886 = vand.u32 %v885, 8388607
    %v887 = vor.u32 %v886, 8388608
    %v888 = vsub.s32 0, %v887
    %v889 = vadd.s32 %v884, 1
    %vm890 = vcmp.gt.s32.totalorder %v889, 0
    %v891 = vsel %vm890, %v889, 0
    %v892 = vshrl.u32 %v891, 5
    %v893 = vand.u32 %v891, 31
    %v894 = vsub.s32 32, %v893
    %v895 = vshrl.u32 683565275, %v894
    %v896 = vshll.u32 683565275, %v893
    %v897 = vshrl.u32 2475754826, %v894
    %v898 = vor.u32 %v896, %v897
    %v899 = vshll.u32 2475754826, %v893
    %v900 = vshrl.u32 2131351028, %v894
    %v901 = vor.u32 %v899, %v900
    %v902 = vshll.u32 2131351028, %v893
    %v903 = vshrl.u32 2102212464, %v894
    %v904 = vor.u32 %v902, %v903
    %v905 = vshll.u32 2102212464, %v893
    %v906 = vshrl.u32 920167782, %v894
    %v907 = vor.u32 %v905, %v906
    %v908 = vshll.u32 920167782, %v893
    %v909 = vshrl.u32 1326507024, %v894
    %v910 = vor.u32 %v908, %v909
    %vm911 = vcmp.lt.s32.totalorder %v892, 1
    %vm912 = vcmp.lt.s32.totalorder %v892, 2
    %vm913 = vcmp.lt.s32.totalorder %v892, 3
    %vm914 = vcmp.lt.s32.totalorder %v892, 4
    %v915 = vsel %vm911, %v895, %v898
    %v916 = vsel %vm914, %v904, 2102212464
    %v917 = vsel %vm913, %v901, %v916
    %v918 = vsel %vm912, %v915, %v917
    %v919 = vsel %vm911, %v898, %v901
    %v920 = vsel %vm914, %v907, 920167782
    %v921 = vsel %vm913, %v904, %v920
    %v922 = vsel %vm912, %v919, %v921
    %v923 = vsel %vm911, %v901, %v904
    %v924 = vsel %vm914, %v910, 1326507024
    %v925 = vsel %vm913, %v907, %v924
    %v926 = vsel %vm912, %v923, %v925
    %v927 = vshll.u32 %v887, 8
    %v928 = vmul.u32.u64.compose %v927, %v926
    %v929 = vextract.low.u32 %v928
    %v930 = vextract.high.u32 %v928
    %v931 = vmul.u32.u64.compose %v927, %v922
    %v932 = vextract.low.u32 %v931
    %v933 = vextract.high.u32 %v931
    %v934 = vmul.u32 %v927, %v918
    %v935 = vadd.s32 %v930, %v932
    %vm936 = vc.u32 %v930, %v932
    %v937 = vadd.s32 %v933, 1
    %v938 = vsel %vm936, %v937, %v933
    %v939 = vadd.s32 %v934, %v938
    %v940 = vadd.s32 %v939, 536870912
    %v941 = vshrl.u32 %v940, 30
    %v942 = vshll.u32 %v941, 30
    %v943 = vsub.s32 %v939, %v942
    %vm944 = vcmp.lt.s32.totalorder %v943, 0
    %v945 = vsub.s32 0, %v943
    %v946 = vsel %vm944, %v945, %v943
    %v947 = vclz %v946
    %v948 = vsub.s32 %v947, 2
    %vm949 = vcmp.gt.s32.totalorder 0, %v948
    %v950 = vsel %vm949, 0, %v948
    %v951 = vsub.s32 32, %v950
    %v952 = vshll.u32 %v943, %v950
    %v953 = vshrl.u32 %v935, %v951
    %v954 = vor.u32 %v952, %v953
    %v955 = vsub.s32 4294967266, %v950
    %v956 = vadd.s32 %v955, 127
    %v957 = vshll.u32 %v956, 23
    %v958 = vor.u32 4788187, %v957
    %v959 = vand.u32 2147483647, %v958
    %v961 = vcvt.s32.f32 %v954
    %v962 = vmul.f32 %v961, %v959
    %v963 = vxor.u32 %v962, 2147483648
    %v964 = vsel %vm881, %v963, %v962
    %v965 = vsub.s32 4, %v941
    %v966 = vsel %vm881, %v965, %v941
    %v967 = vsel %vm880, %v47, %v964
    %v968 = vsel %vm880, 0, %v966
    %v969 = vcosq.f32.pop %v967
    %v970 = vsinq.f32.pop %v967
    %vm971 = vweird.f32 %v47
    %v972 = vand.u32 %v968, 3
    %vm973 = vcmp.lt.s32.totalorder %v972, 2
    %vm974 = vcmp.eq.s32.totalorder %v972, 0
    %v975 = vxor.u32 %v970, 2147483648
    %v976 = vsel %vm974, %v969, %v975
    %vm977 = vcmp.eq.s32.totalorder %v972, 2
    %v978 = vxor.u32 %v969, 2147483648
    %v979 = vsel %vm977, %v978, %v970
    %v980 = vsel %vm973, %v976, %v979
    %v981 = vsel %vm971, nan, %v980
    %v982 = vand.u32 2147483647, %v48
    %vm983 = vcmp.le.f32.partialorder %v982, 0.7853982
    %vm984 = vcmp.lt.s32.totalorder %v48, 0
    %v985 = vand.u32 %v48, 2139095040
    %v986 = vshrl.u32 %v985, 23
    %v987 = vsub.s32 %v986, 127
    %v988 = vand.u32 2147483647, %v48
    %v989 = vand.u32 %v988, 8388607
    %v990 = vor.u32 %v989, 8388608
    %v991 = vsub.s32 0, %v990
    %v992 = vadd.s32 %v987, 1
    %vm993 = vcmp.gt.s32.totalorder %v992, 0
    %v994 = vsel %vm993, %v992, 0
    %v995 = vshrl.u32 %v994, 5
    %v996 = vand.u32 %v994, 31
    %v997 = vsub.s32 32, %v996
    %v998 = vshrl.u32 683565275, %v997
    %v999 = vshll.u32 683565275, %v996
    %v1000 = vshrl.u32 2475754826, %v997
    %v1001 = vor.u32 %v999, %v1000
    %v1002 = vshll.u32 2475754826, %v996
    %v1003 = vshrl.u32 2131351028, %v997
    %v1004 = vor.u32 %v1002, %v1003
    %v1005 = vshll.u32 2131351028, %v996
    %v1006 = vshrl.u32 2102212464, %v997
    %v1007 = vor.u32 %v1005, %v1006
    %v1008 = vshll.u32 2102212464, %v996
    %v1009 = vshrl.u32 920167782, %v997
    %v1010 = vor.u32 %v1008, %v1009
    %v1011 = vshll.u32 920167782, %v996
    %v1012 = vshrl.u32 1326507024, %v997
    %v1013 = vor.u32 %v1011, %v1012
    %vm1014 = vcmp.lt.s32.totalorder %v995, 1
    %vm1015 = vcmp.lt.s32.totalorder %v995, 2
    %vm1016 = vcmp.lt.s32.totalorder %v995, 3
    %vm1017 = vcmp.lt.s32.totalorder %v995, 4
    %v1018 = vsel %vm1014, %v998, %v1001
    %v1019 = vsel %vm1017, %v1007, 2102212464
    %v1020 = vsel %vm1016, %v1004, %v1019
    %v1021 = vsel %vm1015, %v1018, %v1020
    %v1022 = vsel %vm1014, %v1001, %v1004
    %v1023 = vsel %vm1017, %v1010, 920167782
    %v1024 = vsel %vm1016, %v1007, %v1023
    %v1025 = vsel %vm1015, %v1022, %v1024
    %v1026 = vsel %vm1014, %v1004, %v1007
    %v1027 = vsel %vm1017, %v1013, 1326507024
    %v1028 = vsel %vm1016, %v1010, %v1027
    %v1029 = vsel %vm1015, %v1026, %v1028
    %v1030 = vshll.u32 %v990, 8
    %v1031 = vmul.u32.u64.compose %v1030, %v1029
    %v1032 = vextract.low.u32 %v1031
    %v1033 = vextract.high.u32 %v1031
    %v1034 = vmul.u32.u64.compose %v1030, %v1025
    %v1035 = vextract.low.u32 %v1034
    %v1036 = vextract.high.u32 %v1034
    %v1037 = vmul.u32 %v1030, %v1021
    %v1038 = vadd.s32 %v1033, %v1035
    %vm1039 = vc.u32 %v1033, %v1035
    %v1040 = vadd.s32 %v1036, 1
    %v1041 = vsel %vm1039, %v1040, %v1036
    %v1042 = vadd.s32 %v1037, %v1041
    %v1043 = vadd.s32 %v1042, 536870912
    %v1044 = vshrl.u32 %v1043, 30
    %v1045 = vshll.u32 %v1044, 30
    %v1046 = vsub.s32 %v1042, %v1045
    %vm1047 = vcmp.lt.s32.totalorder %v1046, 0
    %v1048 = vsub.s32 0, %v1046
    %v1049 = vsel %vm1047, %v1048, %v1046
    %v1050 = vclz %v1049
    %v1051 = vsub.s32 %v1050, 2
    %vm1052 = vcmp.gt.s32.totalorder 0, %v1051
    %v1053 = vsel %vm1052, 0, %v1051
    %v1054 = vsub.s32 32, %v1053
    %v1055 = vshll.u32 %v1046, %v1053
    %v1056 = vshrl.u32 %v1038, %v1054
    %v1057 = vor.u32 %v1055, %v1056
    %v1058 = vsub.s32 4294967266, %v1053
    %v1059 = vadd.s32 %v1058, 127
    %v1060 = vshll.u32 %v1059, 23
    %v1061 = vor.u32 4788187, %v1060
    %v1062 = vand.u32 2147483647, %v1061
    %v1064 = vcvt.s32.f32 %v1057
    %v1065 = vmul.f32 %v1064, %v1062
    %v1066 = vxor.u32 %v1065, 2147483648
    %v1067 = vsel %vm984, %v1066, %v1065
    %v1068 = vsub.s32 4, %v1044
    %v1069 = vsel %vm984, %v1068, %v1044
    %v1070 = vsel %vm983, %v48, %v1067
    %v1071 = vsel %vm983, 0, %v1069
    %v1072 = vcosq.f32.pop %v1070
    %v1073 = vsinq.f32.pop %v1070
    %vm1074 = vweird.f32 %v48
    %v1075 = vand.u32 %v1071, 3
    %vm1076 = vcmp.lt.s32.totalorder %v1075, 2
    %vm1077 = vcmp.eq.s32.totalorder %v1075, 0
    %v1078 = vxor.u32 %v1073, 2147483648
    %v1079 = vsel %vm1077, %v1072, %v1078
    %vm1080 = vcmp.eq.s32.totalorder %v1075, 2
    %v1081 = vxor.u32 %v1072, 2147483648
    %v1082 = vsel %vm1080, %v1081, %v1073
    %v1083 = vsel %vm1076, %v1079, %v1082
    %v1084 = vsel %vm1074, nan, %v1083
    %v1085 = vand.u32 2147483647, %v49
    %vm1086 = vcmp.le.f32.partialorder %v1085, 0.7853982
    %vm1087 = vcmp.lt.s32.totalorder %v49, 0
    %v1088 = vand.u32 %v49, 2139095040
    %v1089 = vshrl.u32 %v1088, 23
    %v1090 = vsub.s32 %v1089, 127
    %v1091 = vand.u32 2147483647, %v49
    %v1092 = vand.u32 %v1091, 8388607
    %v1093 = vor.u32 %v1092, 8388608
    %v1094 = vsub.s32 0, %v1093
    %v1095 = vadd.s32 %v1090, 1
    %vm1096 = vcmp.gt.s32.totalorder %v1095, 0
    %v1097 = vsel %vm1096, %v1095, 0
    %v1098 = vshrl.u32 %v1097, 5
    %v1099 = vand.u32 %v1097, 31
    %v1100 = vsub.s32 32, %v1099
    %v1101 = vshrl.u32 683565275, %v1100
    %v1102 = vshll.u32 683565275, %v1099
    %v1103 = vshrl.u32 2475754826, %v1100
    %v1104 = vor.u32 %v1102, %v1103
    %v1105 = vshll.u32 2475754826, %v1099
    %v1106 = vshrl.u32 2131351028, %v1100
    %v1107 = vor.u32 %v1105, %v1106
    %v1108 = vshll.u32 2131351028, %v1099
    %v1109 = vshrl.u32 2102212464, %v1100
    %v1110 = vor.u32 %v1108, %v1109
    %v1111 = vshll.u32 2102212464, %v1099
    %v1112 = vshrl.u32 920167782, %v1100
    %v1113 = vor.u32 %v1111, %v1112
    %v1114 = vshll.u32 920167782, %v1099
    %v1115 = vshrl.u32 1326507024, %v1100
    %v1116 = vor.u32 %v1114, %v1115
    %vm1117 = vcmp.lt.s32.totalorder %v1098, 1
    %vm1118 = vcmp.lt.s32.totalorder %v1098, 2
    %vm1119 = vcmp.lt.s32.totalorder %v1098, 3
    %vm1120 = vcmp.lt.s32.totalorder %v1098, 4
    %v1121 = vsel %vm1117, %v1101, %v1104
    %v1122 = vsel %vm1120, %v1110, 2102212464
    %v1123 = vsel %vm1119, %v1107, %v1122
    %v1124 = vsel %vm1118, %v1121, %v1123
    %v1125 = vsel %vm1117, %v1104, %v1107
    %v1126 = vsel %vm1120, %v1113, 920167782
    %v1127 = vsel %vm1119, %v1110, %v1126
    %v1128 = vsel %vm1118, %v1125, %v1127
    %v1129 = vsel %vm1117, %v1107, %v1110
    %v1130 = vsel %vm1120, %v1116, 1326507024
    %v1131 = vsel %vm1119, %v1113, %v1130
    %v1132 = vsel %vm1118, %v1129, %v1131
    %v1133 = vshll.u32 %v1093, 8
    %v1134 = vmul.u32.u64.compose %v1133, %v1132
    %v1135 = vextract.low.u32 %v1134
    %v1136 = vextract.high.u32 %v1134
    %v1137 = vmul.u32.u64.compose %v1133, %v1128
    %v1138 = vextract.low.u32 %v1137
    %v1139 = vextract.high.u32 %v1137
    %v1140 = vmul.u32 %v1133, %v1124
    %v1141 = vadd.s32 %v1136, %v1138
    %vm1142 = vc.u32 %v1136, %v1138
    %v1143 = vadd.s32 %v1139, 1
    %v1144 = vsel %vm1142, %v1143, %v1139
    %v1145 = vadd.s32 %v1140, %v1144
    %v1146 = vadd.s32 %v1145, 536870912
    %v1147 = vshrl.u32 %v1146, 30
    %v1148 = vshll.u32 %v1147, 30
    %v1149 = vsub.s32 %v1145, %v1148
    %vm1150 = vcmp.lt.s32.totalorder %v1149, 0
    %v1151 = vsub.s32 0, %v1149
    %v1152 = vsel %vm1150, %v1151, %v1149
    %v1153 = vclz %v1152
    %v1154 = vsub.s32 %v1153, 2
    %vm1155 = vcmp.gt.s32.totalorder 0, %v1154
    %v1156 = vsel %vm1155, 0, %v1154
    %v1157 = vsub.s32 32, %v1156
    %v1158 = vshll.u32 %v1149, %v1156
    %v1159 = vshrl.u32 %v1141, %v1157
    %v1160 = vor.u32 %v1158, %v1159
    %v1161 = vsub.s32 4294967266, %v1156
    %v1162 = vadd.s32 %v1161, 127
    %v1163 = vshll.u32 %v1162, 23
    %v1164 = vor.u32 4788187, %v1163
    %v1165 = vand.u32 2147483647, %v1164
    %v1167 = vcvt.s32.f32 %v1160
    %v1168 = vmul.f32 %v1167, %v1165
    %v1169 = vxor.u32 %v1168, 2147483648
    %v1170 = vsel %vm1087, %v1169, %v1168
    %v1171 = vsub.s32 4, %v1147
    %v1172 = vsel %vm1087, %v1171, %v1147
    %v1173 = vsel %vm1086, %v49, %v1170
    %v1174 = vsel %vm1086, 0, %v1172
    %v1175 = vcosq.f32.pop %v1173
    %v1176 = vsinq.f32.pop %v1173
    %vm1177 = vweird.f32 %v49
    %v1178 = vand.u32 %v1174, 3
    %vm1179 = vcmp.lt.s32.totalorder %v1178, 2
    %vm1180 = vcmp.eq.s32.totalorder %v1178, 0
    %v1181 = vxor.u32 %v1176, 2147483648
    %v1182 = vsel %vm1180, %v1175, %v1181
    %vm1183 = vcmp.eq.s32.totalorder %v1178, 2
    %v1184 = vxor.u32 %v1175, 2147483648
    %v1185 = vsel %vm1183, %v1184, %v1176
    %v1186 = vsel %vm1179, %v1182, %v1185
    %v1187 = vsel %vm1177, nan, %v1186
    %v1188 = vand.u32 2147483647, %v50
    %vm1189 = vcmp.le.f32.partialorder %v1188, 0.7853982
    %vm1190 = vcmp.lt.s32.totalorder %v50, 0
    %v1191 = vand.u32 %v50, 2139095040
    %v1192 = vshrl.u32 %v1191, 23
    %v1193 = vsub.s32 %v1192, 127
    %v1194 = vand.u32 2147483647, %v50
    %v1195 = vand.u32 %v1194, 8388607
    %v1196 = vor.u32 %v1195, 8388608
    %v1197 = vsub.s32 0, %v1196
    %v1198 = vadd.s32 %v1193, 1
    %vm1199 = vcmp.gt.s32.totalorder %v1198, 0
    %v1200 = vsel %vm1199, %v1198, 0
    %v1201 = vshrl.u32 %v1200, 5
    %v1202 = vand.u32 %v1200, 31
    %v1203 = vsub.s32 32, %v1202
    %v1204 = vshrl.u32 683565275, %v1203
    %v1205 = vshll.u32 683565275, %v1202
    %v1206 = vshrl.u32 2475754826, %v1203
    %v1207 = vor.u32 %v1205, %v1206
    %v1208 = vshll.u32 2475754826, %v1202
    %v1209 = vshrl.u32 2131351028, %v1203
    %v1210 = vor.u32 %v1208, %v1209
    %v1211 = vshll.u32 2131351028, %v1202
    %v1212 = vshrl.u32 2102212464, %v1203
    %v1213 = vor.u32 %v1211, %v1212
    %v1214 = vshll.u32 2102212464, %v1202
    %v1215 = vshrl.u32 920167782, %v1203
    %v1216 = vor.u32 %v1214, %v1215
    %v1217 = vshll.u32 920167782, %v1202
    %v1218 = vshrl.u32 1326507024, %v1203
    %v1219 = vor.u32 %v1217, %v1218
    %vm1220 = vcmp.lt.s32.totalorder %v1201, 1
    %vm1221 = vcmp.lt.s32.totalorder %v1201, 2
    %vm1222 = vcmp.lt.s32.totalorder %v1201, 3
    %vm1223 = vcmp.lt.s32.totalorder %v1201, 4
    %v1224 = vsel %vm1220, %v1204, %v1207
    %v1225 = vsel %vm1223, %v1213, 2102212464
    %v1226 = vsel %vm1222, %v1210, %v1225
    %v1227 = vsel %vm1221, %v1224, %v1226
    %v1228 = vsel %vm1220, %v1207, %v1210
    %v1229 = vsel %vm1223, %v1216, 920167782
    %v1230 = vsel %vm1222, %v1213, %v1229
    %v1231 = vsel %vm1221, %v1228, %v1230
    %v1232 = vsel %vm1220, %v1210, %v1213
    %v1233 = vsel %vm1223, %v1219, 1326507024
    %v1234 = vsel %vm1222, %v1216, %v1233
    %v1235 = vsel %vm1221, %v1232, %v1234
    %v1236 = vshll.u32 %v1196, 8
    %v1237 = vmul.u32.u64.compose %v1236, %v1235
    %v1238 = vextract.low.u32 %v1237
    %v1239 = vextract.high.u32 %v1237
    %v1240 = vmul.u32.u64.compose %v1236, %v1231
    %v1241 = vextract.low.u32 %v1240
    %v1242 = vextract.high.u32 %v1240
    %v1243 = vmul.u32 %v1236, %v1227
    %v1244 = vadd.s32 %v1239, %v1241
    %vm1245 = vc.u32 %v1239, %v1241
    %v1246 = vadd.s32 %v1242, 1
    %v1247 = vsel %vm1245, %v1246, %v1242
    %v1248 = vadd.s32 %v1243, %v1247
    %v1249 = vadd.s32 %v1248, 536870912
    %v1250 = vshrl.u32 %v1249, 30
    %v1251 = vshll.u32 %v1250, 30
    %v1252 = vsub.s32 %v1248, %v1251
    %vm1253 = vcmp.lt.s32.totalorder %v1252, 0
    %v1254 = vsub.s32 0, %v1252
    %v1255 = vsel %vm1253, %v1254, %v1252
    %v1256 = vclz %v1255
    %v1257 = vsub.s32 %v1256, 2
    %vm1258 = vcmp.gt.s32.totalorder 0, %v1257
    %v1259 = vsel %vm1258, 0, %v1257
    %v1260 = vsub.s32 32, %v1259
    %v1261 = vshll.u32 %v1252, %v1259
    %v1262 = vshrl.u32 %v1244, %v1260
    %v1263 = vor.u32 %v1261, %v1262
    %v1264 = vsub.s32 4294967266, %v1259
    %v1265 = vadd.s32 %v1264, 127
    %v1266 = vshll.u32 %v1265, 23
    %v1267 = vor.u32 4788187, %v1266
    %v1268 = vand.u32 2147483647, %v1267
    %v1270 = vcvt.s32.f32 %v1263
    %v1271 = vmul.f32 %v1270, %v1268
    %v1272 = vxor.u32 %v1271, 2147483648
    %v1273 = vsel %vm1190, %v1272, %v1271
    %v1274 = vsub.s32 4, %v1250
    %v1275 = vsel %vm1190, %v1274, %v1250
    %v1276 = vsel %vm1189, %v50, %v1273
    %v1277 = vsel %vm1189, 0, %v1275
    %v1278 = vcosq.f32.pop %v1276
    %v1279 = vsinq.f32.pop %v1276
    %vm1280 = vweird.f32 %v50
    %v1281 = vand.u32 %v1277, 3
    %vm1282 = vcmp.lt.s32.totalorder %v1281, 2
    %vm1283 = vcmp.eq.s32.totalorder %v1281, 0
    %v1284 = vxor.u32 %v1279, 2147483648
    %v1285 = vsel %vm1283, %v1278, %v1284
    %vm1286 = vcmp.eq.s32.totalorder %v1281, 2
    %v1287 = vxor.u32 %v1278, 2147483648
    %v1288 = vsel %vm1286, %v1287, %v1279
    %v1289 = vsel %vm1282, %v1285, %v1288
    %v1290 = vsel %vm1280, nan, %v1289
    %v1291 = vand.u32 2147483647, %v51
    %vm1292 = vcmp.le.f32.partialorder %v1291, 0.7853982
    %vm1293 = vcmp.lt.s32.totalorder %v51, 0
    %v1294 = vand.u32 %v51, 2139095040
    %v1295 = vshrl.u32 %v1294, 23
    %v1296 = vsub.s32 %v1295, 127
    %v1297 = vand.u32 2147483647, %v51
    %v1298 = vand.u32 %v1297, 8388607
    %v1299 = vor.u32 %v1298, 8388608
    %v1300 = vsub.s32 0, %v1299
    %v1301 = vadd.s32 %v1296, 1
    %vm1302 = vcmp.gt.s32.totalorder %v1301, 0
    %v1303 = vsel %vm1302, %v1301, 0
    %v1304 = vshrl.u32 %v1303, 5
    %v1305 = vand.u32 %v1303, 31
    %v1306 = vsub.s32 32, %v1305
    %v1307 = vshrl.u32 683565275, %v1306
    %v1308 = vshll.u32 683565275, %v1305
    %v1309 = vshrl.u32 2475754826, %v1306
    %v1310 = vor.u32 %v1308, %v1309
    %v1311 = vshll.u32 2475754826, %v1305
    %v1312 = vshrl.u32 2131351028, %v1306
    %v1313 = vor.u32 %v1311, %v1312
    %v1314 = vshll.u32 2131351028, %v1305
    %v1315 = vshrl.u32 2102212464, %v1306
    %v1316 = vor.u32 %v1314, %v1315
    %v1317 = vshll.u32 2102212464, %v1305
    %v1318 = vshrl.u32 920167782, %v1306
    %v1319 = vor.u32 %v1317, %v1318
    %v1320 = vshll.u32 920167782, %v1305
    %v1321 = vshrl.u32 1326507024, %v1306
    %v1322 = vor.u32 %v1320, %v1321
    %vm1323 = vcmp.lt.s32.totalorder %v1304, 1
    %vm1324 = vcmp.lt.s32.totalorder %v1304, 2
    %vm1325 = vcmp.lt.s32.totalorder %v1304, 3
    %vm1326 = vcmp.lt.s32.totalorder %v1304, 4
    %v1327 = vsel %vm1323, %v1307, %v1310
    %v1328 = vsel %vm1326, %v1316, 2102212464
    %v1329 = vsel %vm1325, %v1313, %v1328
    %v1330 = vsel %vm1324, %v1327, %v1329
    %v1331 = vsel %vm1323, %v1310, %v1313
    %v1332 = vsel %vm1326, %v1319, 920167782
    %v1333 = vsel %vm1325, %v1316, %v1332
    %v1334 = vsel %vm1324, %v1331, %v1333
    %v1335 = vsel %vm1323, %v1313, %v1316
    %v1336 = vsel %vm1326, %v1322, 1326507024
    %v1337 = vsel %vm1325, %v1319, %v1336
    %v1338 = vsel %vm1324, %v1335, %v1337
    %v1339 = vshll.u32 %v1299, 8
    %v1340 = vmul.u32.u64.compose %v1339, %v1338
    %v1341 = vextract.low.u32 %v1340
    %v1342 = vextract.high.u32 %v1340
    %v1343 = vmul.u32.u64.compose %v1339, %v1334
    %v1344 = vextract.low.u32 %v1343
    %v1345 = vextract.high.u32 %v1343
    %v1346 = vmul.u32 %v1339, %v1330
    %v1347 = vadd.s32 %v1342, %v1344
    %vm1348 = vc.u32 %v1342, %v1344
    %v1349 = vadd.s32 %v1345, 1
    %v1350 = vsel %vm1348, %v1349, %v1345
    %v1351 = vadd.s32 %v1346, %v1350
    %v1352 = vadd.s32 %v1351, 536870912
    %v1353 = vshrl.u32 %v1352, 30
    %v1354 = vshll.u32 %v1353, 30
    %v1355 = vsub.s32 %v1351, %v1354
    %vm1356 = vcmp.lt.s32.totalorder %v1355, 0
    %v1357 = vsub.s32 0, %v1355
    %v1358 = vsel %vm1356, %v1357, %v1355
    %v1359 = vclz %v1358
    %v1360 = vsub.s32 %v1359, 2
    %vm1361 = vcmp.gt.s32.totalorder 0, %v1360
    %v1362 = vsel %vm1361, 0, %v1360
    %v1363 = vsub.s32 32, %v1362
    %v1364 = vshll.u32 %v1355, %v1362
    %v1365 = vshrl.u32 %v1347, %v1363
    %v1366 = vor.u32 %v1364, %v1365
    %v1367 = vsub.s32 4294967266, %v1362
    %v1368 = vadd.s32 %v1367, 127
    %v1369 = vshll.u32 %v1368, 23
    %v1370 = vor.u32 4788187, %v1369
    %v1371 = vand.u32 2147483647, %v1370
    %v1373 = vcvt.s32.f32 %v1366
    %v1374 = vmul.f32 %v1373, %v1371
    %v1375 = vxor.u32 %v1374, 2147483648
    %v1376 = vsel %vm1293, %v1375, %v1374
    %v1377 = vsub.s32 4, %v1353
    %v1378 = vsel %vm1293, %v1377, %v1353
    %v1379 = vsel %vm1292, %v51, %v1376
    %v1380 = vsel %vm1292, 0, %v1378
    %v1381 = vcosq.f32.pop %v1379
    %v1382 = vsinq.f32.pop %v1379
    %vm1383 = vweird.f32 %v51
    %v1384 = vand.u32 %v1380, 3
    %vm1385 = vcmp.lt.s32.totalorder %v1384, 2
    %vm1386 = vcmp.eq.s32.totalorder %v1384, 0
    %v1387 = vxor.u32 %v1382, 2147483648
    %v1388 = vsel %vm1386, %v1381, %v1387
    %vm1389 = vcmp.eq.s32.totalorder %v1384, 2
    %v1390 = vxor.u32 %v1381, 2147483648
    %v1391 = vsel %vm1389, %v1390, %v1382
    %v1392 = vsel %vm1385, %v1388, %v1391
    %v1393 = vsel %vm1383, nan, %v1392
    %v1394 = vand.u32 2147483647, %v52
    %vm1395 = vcmp.le.f32.partialorder %v1394, 0.7853982
    %vm1396 = vcmp.lt.s32.totalorder %v52, 0
    %v1397 = vand.u32 %v52, 2139095040
    %v1398 = vshrl.u32 %v1397, 23
    %v1399 = vsub.s32 %v1398, 127
    %v1400 = vand.u32 2147483647, %v52
    %v1401 = vand.u32 %v1400, 8388607
    %v1402 = vor.u32 %v1401, 8388608
    %v1403 = vsub.s32 0, %v1402
    %v1404 = vadd.s32 %v1399, 1
    %vm1405 = vcmp.gt.s32.totalorder %v1404, 0
    %v1406 = vsel %vm1405, %v1404, 0
    %v1407 = vshrl.u32 %v1406, 5
    %v1408 = vand.u32 %v1406, 31
    %v1409 = vsub.s32 32, %v1408
    %v1410 = vshrl.u32 683565275, %v1409
    %v1411 = vshll.u32 683565275, %v1408
    %v1412 = vshrl.u32 2475754826, %v1409
    %v1413 = vor.u32 %v1411, %v1412
    %v1414 = vshll.u32 2475754826, %v1408
    %v1415 = vshrl.u32 2131351028, %v1409
    %v1416 = vor.u32 %v1414, %v1415
    %v1417 = vshll.u32 2131351028, %v1408
    %v1418 = vshrl.u32 2102212464, %v1409
    %v1419 = vor.u32 %v1417, %v1418
    %v1420 = vshll.u32 2102212464, %v1408
    %v1421 = vshrl.u32 920167782, %v1409
    %v1422 = vor.u32 %v1420, %v1421
    %v1423 = vshll.u32 920167782, %v1408
    %v1424 = vshrl.u32 1326507024, %v1409
    %v1425 = vor.u32 %v1423, %v1424
    %vm1426 = vcmp.lt.s32.totalorder %v1407, 1
    %vm1427 = vcmp.lt.s32.totalorder %v1407, 2
    %vm1428 = vcmp.lt.s32.totalorder %v1407, 3
    %vm1429 = vcmp.lt.s32.totalorder %v1407, 4
    %v1430 = vsel %vm1426, %v1410, %v1413
    %v1431 = vsel %vm1429, %v1419, 2102212464
    %v1432 = vsel %vm1428, %v1416, %v1431
    %v1433 = vsel %vm1427, %v1430, %v1432
    %v1434 = vsel %vm1426, %v1413, %v1416
    %v1435 = vsel %vm1429, %v1422, 920167782
    %v1436 = vsel %vm1428, %v1419, %v1435
    %v1437 = vsel %vm1427, %v1434, %v1436
    %v1438 = vsel %vm1426, %v1416, %v1419
    %v1439 = vsel %vm1429, %v1425, 1326507024
    %v1440 = vsel %vm1428, %v1422, %v1439
    %v1441 = vsel %vm1427, %v1438, %v1440
    %v1442 = vshll.u32 %v1402, 8
    %v1443 = vmul.u32.u64.compose %v1442, %v1441
    %v1444 = vextract.low.u32 %v1443
    %v1445 = vextract.high.u32 %v1443
    %v1446 = vmul.u32.u64.compose %v1442, %v1437
    %v1447 = vextract.low.u32 %v1446
    %v1448 = vextract.high.u32 %v1446
    %v1449 = vmul.u32 %v1442, %v1433
    %v1450 = vadd.s32 %v1445, %v1447
    %vm1451 = vc.u32 %v1445, %v1447
    %v1452 = vadd.s32 %v1448, 1
    %v1453 = vsel %vm1451, %v1452, %v1448
    %v1454 = vadd.s32 %v1449, %v1453
    %v1455 = vadd.s32 %v1454, 536870912
    %v1456 = vshrl.u32 %v1455, 30
    %v1457 = vshll.u32 %v1456, 30
    %v1458 = vsub.s32 %v1454, %v1457
    %vm1459 = vcmp.lt.s32.totalorder %v1458, 0
    %v1460 = vsub.s32 0, %v1458
    %v1461 = vsel %vm1459, %v1460, %v1458
    %v1462 = vclz %v1461
    %v1463 = vsub.s32 %v1462, 2
    %vm1464 = vcmp.gt.s32.totalorder 0, %v1463
    %v1465 = vsel %vm1464, 0, %v1463
    %v1466 = vsub.s32 32, %v1465
    %v1467 = vshll.u32 %v1458, %v1465
    %v1468 = vshrl.u32 %v1450, %v1466
    %v1469 = vor.u32 %v1467, %v1468
    %v1470 = vsub.s32 4294967266, %v1465
    %v1471 = vadd.s32 %v1470, 127
    %v1472 = vshll.u32 %v1471, 23
    %v1473 = vor.u32 4788187, %v1472
    %v1474 = vand.u32 2147483647, %v1473
    %v1476 = vcvt.s32.f32 %v1469
    %v1477 = vmul.f32 %v1476, %v1474
    %v1478 = vxor.u32 %v1477, 2147483648
    %v1479 = vsel %vm1396, %v1478, %v1477
    %v1480 = vsub.s32 4, %v1456
    %v1481 = vsel %vm1396, %v1480, %v1456
    %v1482 = vsel %vm1395, %v52, %v1479
    %v1483 = vsel %vm1395, 0, %v1481
    %v1484 = vcosq.f32.pop %v1482
    %v1485 = vsinq.f32.pop %v1482
    %vm1486 = vweird.f32 %v52
    %v1487 = vand.u32 %v1483, 3
    %vm1488 = vcmp.lt.s32.totalorder %v1487, 2
    %vm1489 = vcmp.eq.s32.totalorder %v1487, 0
    %v1490 = vxor.u32 %v1485, 2147483648
    %v1491 = vsel %vm1489, %v1484, %v1490
    %vm1492 = vcmp.eq.s32.totalorder %v1487, 2
    %v1493 = vxor.u32 %v1484, 2147483648
    %v1494 = vsel %vm1492, %v1493, %v1485
    %v1495 = vsel %vm1488, %v1491, %v1494
    %v1496 = vsel %vm1486, nan, %v1495
    %v1497 = vand.u32 2147483647, %v53
    %vm1498 = vcmp.le.f32.partialorder %v1497, 0.7853982
    %vm1499 = vcmp.lt.s32.totalorder %v53, 0
    %v1500 = vand.u32 %v53, 2139095040
    %v1501 = vshrl.u32 %v1500, 23
    %v1502 = vsub.s32 %v1501, 127
    %v1503 = vand.u32 2147483647, %v53
    %v1504 = vand.u32 %v1503, 8388607
    %v1505 = vor.u32 %v1504, 8388608
    %v1506 = vsub.s32 0, %v1505
    %v1507 = vadd.s32 %v1502, 1
    %vm1508 = vcmp.gt.s32.totalorder %v1507, 0
    %v1509 = vsel %vm1508, %v1507, 0
    %v1510 = vshrl.u32 %v1509, 5
    %v1511 = vand.u32 %v1509, 31
    %v1512 = vsub.s32 32, %v1511
    %v1513 = vshrl.u32 683565275, %v1512
    %v1514 = vshll.u32 683565275, %v1511
    %v1515 = vshrl.u32 2475754826, %v1512
    %v1516 = vor.u32 %v1514, %v1515
    %v1517 = vshll.u32 2475754826, %v1511
    %v1518 = vshrl.u32 2131351028, %v1512
    %v1519 = vor.u32 %v1517, %v1518
    %v1520 = vshll.u32 2131351028, %v1511
    %v1521 = vshrl.u32 2102212464, %v1512
    %v1522 = vor.u32 %v1520, %v1521
    %v1523 = vshll.u32 2102212464, %v1511
    %v1524 = vshrl.u32 920167782, %v1512
    %v1525 = vor.u32 %v1523, %v1524
    %v1526 = vshll.u32 920167782, %v1511
    %v1527 = vshrl.u32 1326507024, %v1512
    %v1528 = vor.u32 %v1526, %v1527
    %vm1529 = vcmp.lt.s32.totalorder %v1510, 1
    %vm1530 = vcmp.lt.s32.totalorder %v1510, 2
    %vm1531 = vcmp.lt.s32.totalorder %v1510, 3
    %vm1532 = vcmp.lt.s32.totalorder %v1510, 4
    %v1533 = vsel %vm1529, %v1513, %v1516
    %v1534 = vsel %vm1532, %v1522, 2102212464
    %v1535 = vsel %vm1531, %v1519, %v1534
    %v1536 = vsel %vm1530, %v1533, %v1535
    %v1537 = vsel %vm1529, %v1516, %v1519
    %v1538 = vsel %vm1532, %v1525, 920167782
    %v1539 = vsel %vm1531, %v1522, %v1538
    %v1540 = vsel %vm1530, %v1537, %v1539
    %v1541 = vsel %vm1529, %v1519, %v1522
    %v1542 = vsel %vm1532, %v1528, 1326507024
    %v1543 = vsel %vm1531, %v1525, %v1542
    %v1544 = vsel %vm1530, %v1541, %v1543
    %v1545 = vshll.u32 %v1505, 8
    %v1546 = vmul.u32.u64.compose %v1545, %v1544
    %v1547 = vextract.low.u32 %v1546
    %v1548 = vextract.high.u32 %v1546
    %v1549 = vmul.u32.u64.compose %v1545, %v1540
    %v1550 = vextract.low.u32 %v1549
    %v1551 = vextract.high.u32 %v1549
    %v1552 = vmul.u32 %v1545, %v1536
    %v1553 = vadd.s32 %v1548, %v1550
    %vm1554 = vc.u32 %v1548, %v1550
    %v1555 = vadd.s32 %v1551, 1
    %v1556 = vsel %vm1554, %v1555, %v1551
    %v1557 = vadd.s32 %v1552, %v1556
    %v1558 = vadd.s32 %v1557, 536870912
    %v1559 = vshrl.u32 %v1558, 30
    %v1560 = vshll.u32 %v1559, 30
    %v1561 = vsub.s32 %v1557, %v1560
    %vm1562 = vcmp.lt.s32.totalorder %v1561, 0
    %v1563 = vsub.s32 0, %v1561
    %v1564 = vsel %vm1562, %v1563, %v1561
    %v1565 = vclz %v1564
    %v1566 = vsub.s32 %v1565, 2
    %vm1567 = vcmp.gt.s32.totalorder 0, %v1566
    %v1568 = vsel %vm1567, 0, %v1566
    %v1569 = vsub.s32 32, %v1568
    %v1570 = vshll.u32 %v1561, %v1568
    %v1571 = vshrl.u32 %v1553, %v1569
    %v1572 = vor.u32 %v1570, %v1571
    %v1573 = vsub.s32 4294967266, %v1568
    %v1574 = vadd.s32 %v1573, 127
    %v1575 = vshll.u32 %v1574, 23
    %v1576 = vor.u32 4788187, %v1575
    %v1577 = vand.u32 2147483647, %v1576
    %v1579 = vcvt.s32.f32 %v1572
    %v1580 = vmul.f32 %v1579, %v1577
    %v1581 = vxor.u32 %v1580, 2147483648
    %v1582 = vsel %vm1499, %v1581, %v1580
    %v1583 = vsub.s32 4, %v1559
    %v1584 = vsel %vm1499, %v1583, %v1559
    %v1585 = vsel %vm1498, %v53, %v1582
    %v1586 = vsel %vm1498, 0, %v1584
    %v1587 = vcosq.f32.pop %v1585
    %v1588 = vsinq.f32.pop %v1585
    %vm1589 = vweird.f32 %v53
    %v1590 = vand.u32 %v1586, 3
    %vm1591 = vcmp.lt.s32.totalorder %v1590, 2
    %vm1592 = vcmp.eq.s32.totalorder %v1590, 0
    %v1593 = vxor.u32 %v1588, 2147483648
    %v1594 = vsel %vm1592, %v1587, %v1593
    %vm1595 = vcmp.eq.s32.totalorder %v1590, 2
    %v1596 = vxor.u32 %v1587, 2147483648
    %v1597 = vsel %vm1595, %v1596, %v1588
    %v1598 = vsel %vm1591, %v1594, %v1597
    %v1599 = vsel %vm1589, nan, %v1598
    %v1600 = vand.u32 2147483647, %v54
    %vm1601 = vcmp.le.f32.partialorder %v1600, 0.7853982
    %vm1602 = vcmp.lt.s32.totalorder %v54, 0
    %v1603 = vand.u32 %v54, 2139095040
    %v1604 = vshrl.u32 %v1603, 23
    %v1605 = vsub.s32 %v1604, 127
    %v1606 = vand.u32 2147483647, %v54
    %v1607 = vand.u32 %v1606, 8388607
    %v1608 = vor.u32 %v1607, 8388608
    %v1609 = vsub.s32 0, %v1608
    %v1610 = vadd.s32 %v1605, 1
    %vm1611 = vcmp.gt.s32.totalorder %v1610, 0
    %v1612 = vsel %vm1611, %v1610, 0
    %v1613 = vshrl.u32 %v1612, 5
    %v1614 = vand.u32 %v1612, 31
    %v1615 = vsub.s32 32, %v1614
    %v1616 = vshrl.u32 683565275, %v1615
    %v1617 = vshll.u32 683565275, %v1614
    %v1618 = vshrl.u32 2475754826, %v1615
    %v1619 = vor.u32 %v1617, %v1618
    %v1620 = vshll.u32 2475754826, %v1614
    %v1621 = vshrl.u32 2131351028, %v1615
    %v1622 = vor.u32 %v1620, %v1621
    %v1623 = vshll.u32 2131351028, %v1614
    %v1624 = vshrl.u32 2102212464, %v1615
    %v1625 = vor.u32 %v1623, %v1624
    %v1626 = vshll.u32 2102212464, %v1614
    %v1627 = vshrl.u32 920167782, %v1615
    %v1628 = vor.u32 %v1626, %v1627
    %v1629 = vshll.u32 920167782, %v1614
    %v1630 = vshrl.u32 1326507024, %v1615
    %v1631 = vor.u32 %v1629, %v1630
    %vm1632 = vcmp.lt.s32.totalorder %v1613, 1
    %vm1633 = vcmp.lt.s32.totalorder %v1613, 2
    %vm1634 = vcmp.lt.s32.totalorder %v1613, 3
    %vm1635 = vcmp.lt.s32.totalorder %v1613, 4
    %v1636 = vsel %vm1632, %v1616, %v1619
    %v1637 = vsel %vm1635, %v1625, 2102212464
    %v1638 = vsel %vm1634, %v1622, %v1637
    %v1639 = vsel %vm1633, %v1636, %v1638
    %v1640 = vsel %vm1632, %v1619, %v1622
    %v1641 = vsel %vm1635, %v1628, 920167782
    %v1642 = vsel %vm1634, %v1625, %v1641
    %v1643 = vsel %vm1633, %v1640, %v1642
    %v1644 = vsel %vm1632, %v1622, %v1625
    %v1645 = vsel %vm1635, %v1631, 1326507024
    %v1646 = vsel %vm1634, %v1628, %v1645
    %v1647 = vsel %vm1633, %v1644, %v1646
    %v1648 = vshll.u32 %v1608, 8
    %v1649 = vmul.u32.u64.compose %v1648, %v1647
    %v1650 = vextract.low.u32 %v1649
    %v1651 = vextract.high.u32 %v1649
    %v1652 = vmul.u32.u64.compose %v1648, %v1643
    %v1653 = vextract.low.u32 %v1652
    %v1654 = vextract.high.u32 %v1652
    %v1655 = vmul.u32 %v1648, %v1639
    %v1656 = vadd.s32 %v1651, %v1653
    %vm1657 = vc.u32 %v1651, %v1653
    %v1658 = vadd.s32 %v1654, 1
    %v1659 = vsel %vm1657, %v1658, %v1654
    %v1660 = vadd.s32 %v1655, %v1659
    %v1661 = vadd.s32 %v1660, 536870912
    %v1662 = vshrl.u32 %v1661, 30
    %v1663 = vshll.u32 %v1662, 30
    %v1664 = vsub.s32 %v1660, %v1663
    %vm1665 = vcmp.lt.s32.totalorder %v1664, 0
    %v1666 = vsub.s32 0, %v1664
    %v1667 = vsel %vm1665, %v1666, %v1664
    %v1668 = vclz %v1667
    %v1669 = vsub.s32 %v1668, 2
    %vm1670 = vcmp.gt.s32.totalorder 0, %v1669
    %v1671 = vsel %vm1670, 0, %v1669
    %v1672 = vsub.s32 32, %v1671
    %v1673 = vshll.u32 %v1664, %v1671
    %v1674 = vshrl.u32 %v1656, %v1672
    %v1675 = vor.u32 %v1673, %v1674
    %v1676 = vsub.s32 4294967266, %v1671
    %v1677 = vadd.s32 %v1676, 127
    %v1678 = vshll.u32 %v1677, 23
    %v1679 = vor.u32 4788187, %v1678
    %v1680 = vand.u32 2147483647, %v1679
    %v1682 = vcvt.s32.f32 %v1675
    %v1683 = vmul.f32 %v1682, %v1680
    %v1684 = vxor.u32 %v1683, 2147483648
    %v1685 = vsel %vm1602, %v1684, %v1683
    %v1686 = vsub.s32 4, %v1662
    %v1687 = vsel %vm1602, %v1686, %v1662
    %v1688 = vsel %vm1601, %v54, %v1685
    %v1689 = vsel %vm1601, 0, %v1687
    %v1690 = vcosq.f32.pop %v1688
    %v1691 = vsinq.f32.pop %v1688
    %vm1692 = vweird.f32 %v54
    %v1693 = vand.u32 %v1689, 3
    %vm1694 = vcmp.lt.s32.totalorder %v1693, 2
    %vm1695 = vcmp.eq.s32.totalorder %v1693, 0
    %v1696 = vxor.u32 %v1691, 2147483648
    %v1697 = vsel %vm1695, %v1690, %v1696
    %vm1698 = vcmp.eq.s32.totalorder %v1693, 2
    %v1699 = vxor.u32 %v1690, 2147483648
    %v1700 = vsel %vm1698, %v1699, %v1691
    %v1701 = vsel %vm1694, %v1697, %v1700
    %v1702 = vsel %vm1692, nan, %v1701
    %v1703 = vadd.f32 %v157, 1.0
    %v1704 = vadd.f32 %v260, 1.0
    %v1705 = vadd.f32 %v363, 1.0
    %v1706 = vadd.f32 %v466, 1.0
    %v1707 = vadd.f32 %v569, 1.0
    %v1708 = vadd.f32 %v672, 1.0
    %v1709 = vadd.f32 %v775, 1.0
    %v1710 = vadd.f32 %v878, 1.0
    %v1711 = vadd.f32 %v981, 1.0
    %v1712 = vadd.f32 %v1084, 1.0
    %v1713 = vadd.f32 %v1187, 1.0
    %v1714 = vadd.f32 %v1290, 1.0
    %v1715 = vadd.f32 %v1393, 1.0
    %v1716 = vadd.f32 %v1496, 1.0
    %v1717 = vadd.f32 %v1599, 1.0
    %v1718 = vadd.f32 %v1702, 1.0
    %v1719 = vmul.f32 %v1703, 0.5
    %v1720 = vmul.f32 %v1704, 0.5
    %v1721 = vmul.f32 %v1705, 0.5
    %v1722 = vmul.f32 %v1706, 0.5
    %v1723 = vmul.f32 %v1707, 0.5
    %v1724 = vmul.f32 %v1708, 0.5
    %v1725 = vmul.f32 %v1709, 0.5
    %v1726 = vmul.f32 %v1710, 0.5
    %v1727 = vmul.f32 %v1711, 0.5
    %v1728 = vmul.f32 %v1712, 0.5
    %v1729 = vmul.f32 %v1713, 0.5
    %v1730 = vmul.f32 %v1714, 0.5
    %v1731 = vmul.f32 %v1715, 0.5
    %v1732 = vmul.f32 %v1716, 0.5
    %v1733 = vmul.f32 %v1717, 0.5
    %v1734 = vmul.f32 %v1718, 0.5
    %vm1735 = vcmp.lt.f32.partialorder %v23, 5.0
    %vm1736 = vcmp.lt.f32.partialorder %v24, 5.0
    %vm1737 = vcmp.lt.f32.partialorder %v25, 5.0
    %vm1738 = vcmp.lt.f32.partialorder %v26, 5.0
    %vm1739 = vcmp.lt.f32.partialorder %v27, 5.0
    %vm1740 = vcmp.lt.f32.partialorder %v28, 5.0
    %vm1741 = vcmp.lt.f32.partialorder %v29, 5.0
    %vm1742 = vcmp.lt.f32.partialorder %v30, 5.0
    %vm1743 = vcmp.lt.f32.partialorder %v31, 5.0
    %vm1744 = vcmp.lt.f32.partialorder %v32, 5.0
    %vm1745 = vcmp.lt.f32.partialorder %v33, 5.0
    %vm1746 = vcmp.lt.f32.partialorder %v34, 5.0
    %vm1747 = vcmp.lt.f32.partialorder %v35, 5.0
    %vm1748 = vcmp.lt.f32.partialorder %v36, 5.0
    %vm1749 = vcmp.lt.f32.partialorder %v37, 5.0
    %vm1750 = vcmp.lt.f32.partialorder %v38, 5.0
    %v1751 = vsel %vm1735, %v1719, 0.0
    %v1752 = vsel %vm1736, %v1720, 0.0
    %v1753 = vsel %vm1737, %v1721, 0.0
    %v1754 = vsel %vm1738, %v1722, 0.0
    %v1755 = vsel %vm1739, %v1723, 0.0
    %v1756 = vsel %vm1740, %v1724, 0.0
    %v1757 = vsel %vm1741, %v1725, 0.0
    %v1758 = vsel %vm1742, %v1726, 0.0
    %v1759 = vsel %vm1743, %v1727, 0.0
    %v1760 = vsel %vm1744, %v1728, 0.0
    %v1761 = vsel %vm1745, %v1729, 0.0
    %v1762 = vsel %vm1746, %v1730, 0.0
    %v1763 = vsel %vm1747, %v1731, 0.0
    %v1764 = vsel %vm1748, %v1732, 0.0
    %v1765 = vsel %vm1749, %v1733, 0.0
    %v1766 = vsel %vm1750, %v1734, 0.0
    %1767 = vst [vmem:[#allocation5] sm:$0xff] %v1751
    %1768 = vst [vmem:[#allocation5 + $0x8] sm:$0xff] %v1752
    %1769 = vst [vmem:[#allocation5 + $0x10] sm:$0xff] %v1753
    %1770 = vst [vmem:[#allocation5 + $0x18] sm:$0xff] %v1754
    %1771 = vst [vmem:[#allocation5 + $0x20] sm:$0xff] %v1755
    %1772 = vst [vmem:[#allocation5 + $0x28] sm:$0xff] %v1756
    %1773 = vst [vmem:[#allocation5 + $0x30] sm:$0xff] %v1757
    %1774 = vst [vmem:[#allocation5 + $0x38] sm:$0xff] %v1758
    %1775 = vst [vmem:[#allocation5 + $0x40] sm:$0xff] %v1759
    %1776 = vst [vmem:[#allocation5 + $0x48] sm:$0xff] %v1760
    %1777 = vst [vmem:[#allocation5 + $0x50] sm:$0xff] %v1761
    %1778 = vst [vmem:[#allocation5 + $0x58] sm:$0xff] %v1762
    %1779 = vst [vmem:[#allocation5 + $0x60] sm:$0xff] %v1763
    %1780 = vst [vmem:[#allocation5 + $0x68] sm:$0xff] %v1764
    %1781 = vst [vmem:[#allocation5 + $0x70] sm:$0xff] %v1765
    %1782 = vst [vmem:[#allocation5 + $0x78] sm:$0xff] %v1766
    // Predicated region
    $region10: #{tpu_custom_call.1} parent=1 // pred_check
      _
    $region11: #{tpu_custom_call.1} parent=1 // pred_check_branch
      %1784 = sbr.rel (0) target = $region13
    $region12: #{tpu_custom_call.1} parent=1 // pred_region
      %s1786 = ssub.s32 2048, 2048
      %1787 = vsyncadd [#allocation4], %s1786
      %s1788 = sshll.u32 [#allocation5], 4
      %s1789 = int_to_ptr.vmem [resolvable:$true] %s1788
      %1794 = dma.vmem_to_hbm [thread:$0]  %s1789, 2048, %s1, [#allocation4], 128, 128, 8
    $region13: #{tpu_custom_call.1} parent=1 // pred_fallthru
      _
    // Predicated region
    $region14: #{tpu_custom_call.1} parent=1 // pred_check
      _
    $region15: #{tpu_custom_call.1} parent=1 // pred_check_branch
      %1796 = sbr.rel (0) target = $region17
    $region16: #{tpu_custom_call.1} parent=1 // pred_region
      %1797 = dma.done [#allocation4], 2048
    $region17: #{tpu_custom_call.1} parent=1 // pred_fallthru
      _
    %1798 = vsyncpa [#allocation3], 1
    %1799 = vsyncpa [#allocation4], 1

</llo_original>
